<compile_context>
chip_gen: v6e
topology: v6e:2x2x1
jax: 0.10.0
libtpu: 0.0.40
codegen_flags: <defaults>
</compile_context>

<pallas_src>
import functools

import jax
import jax.numpy as jnp
from jax.experimental import pallas as pl
from jax.experimental.pallas import tpu as pltpu

FORMULA_DIM = 21
HIDDEN_SIZE = 256
FORM_DIM = 16
GLOB_DIM = FORMULA_DIM - FORM_DIM  # 5

_F32 = jax.lax.Precision.HIGHEST  # exact f32 path for the tiny K=21 layer


# ---------------------------------------------------------------------------
# In-kernel helpers
# ---------------------------------------------------------------------------
def _dot_bf16x3(a_f32, b_hi, b_lo):
    """3-pass bf16x3 matmul: a ~ a_hi + a_lo, b ~ b_hi + b_lo (precomputed),
    result = a_hi@b_hi + a_lo@b_hi + a_hi@b_lo, accumulated in f32.
    Near-f32 accuracy at half the MXU passes of the 6-pass f32 path."""
    a_hi = a_f32.astype(jnp.bfloat16)
    a_lo = (a_f32 - a_hi.astype(jnp.float32)).astype(jnp.bfloat16)
    out = jnp.dot(a_hi, b_hi, preferred_element_type=jnp.float32)
    out = out + jnp.dot(a_lo, b_hi, preferred_element_type=jnp.float32)
    out = out + jnp.dot(a_hi, b_lo, preferred_element_type=jnp.float32)
    return out


# ---------------------------------------------------------------------------
# Kernels
# ---------------------------------------------------------------------------
def _kernel_fused(x_ref, w1_ref, b1_ref, w2h_ref, w2l_ref, b2_ref,
                  w1dh_ref, w1dl_ref, b1d_ref, w2dh_ref, w2dl_ref, b2d_ref,
                  o_ref):
    """v6e/v7x path: block-diag layer 1 + layer 2, half-sum folded into W1d."""
    x = x_ref[...]                                                  # (TN, 21)

    # fused form/global layer 1: 21 -> 256 (cols 0..127 form, 128..255 global)
    h = jnp.dot(x, w1_ref[...], preferred_element_type=jnp.float32,
                precision=_F32) + b1_ref[...]
    h = jnp.maximum(h, 0.0)                                         # (TN, 256)

    # fused layer 2 (block-diag 256x256), bf16x3
    h2 = jnp.maximum(_dot_bf16x3(h, w2h_ref[...], w2l_ref[...]) + b2_ref[...],
                     0.0)                                           # (TN, 256)

    # dense_encoder; half-sum folded: h2 @ [W1d; W1d] == (h2[:, :128]+h2[:,128:]) @ W1d
    d = jnp.maximum(_dot_bf16x3(h2, w1dh_ref[...], w1dl_ref[...]) + b1d_ref[...],
                    0.0)                                            # (TN, 256)
    d = jnp.maximum(_dot_bf16x3(d, w2dh_ref[...], w2dl_ref[...]) + b2d_ref[...],
                    0.0)                                            # (TN, 256)

    o_ref[...] = d.astype(o_ref.dtype)


def _kernel_split(x_ref, w1_ref, b1_ref, w2fh_ref, w2fl_ref, b2f_ref,
                  w2gh_ref, w2gl_ref, b2g_ref, w1dh_ref, w1dl_ref, b1d_ref,
                  w2dh_ref, w2dl_ref, b2d_ref, o_ref):
    """v5e path (128x128 MXU): layer 1 fused, layer 2 as two 128-wide matmuls."""
    x = x_ref[...]                                                  # (TN, 21)

    h = jnp.dot(x, w1_ref[...], preferred_element_type=jnp.float32,
                precision=_F32) + b1_ref[...]
    h = jnp.maximum(h, 0.0)                                         # (TN, 256)

    half = h.shape[1] // 2
    hf = h[:, :half]                                                # 128-aligned slice, free
    hg = h[:, half:]

    form = jnp.maximum(_dot_bf16x3(hf, w2fh_ref[...], w2fl_ref[...]) + b2f_ref[...], 0.0)
    glob = jnp.maximum(_dot_bf16x3(hg, w2gh_ref[...], w2gl_ref[...]) + b2g_ref[...], 0.0)
    z = form + glob                                                 # (TN, 128)

    d = jnp.maximum(_dot_bf16x3(z, w1dh_ref[...], w1dl_ref[...]) + b1d_ref[...], 0.0)
    d = jnp.maximum(_dot_bf16x3(d, w2dh_ref[...], w2dl_ref[...]) + b2d_ref[...], 0.0)

    o_ref[...] = d.astype(o_ref.dtype)


# ---------------------------------------------------------------------------
# Device probing + tiling heuristic
# ---------------------------------------------------------------------------
def _device_kind():
    try:
        return jax.devices()[0].device_kind.lower()
    except Exception:
        return ""


def default_fuse_l2(kind=None):
    """Fuse the 2nd encoder layer into a 256x256 block-diag matmul only on chips
    with a 256-wide MXU (v6e/v7x). On 128x128-MXU chips it would double work."""
    kind = _device_kind() if kind is None else kind
    return not any(t in kind for t in ("v2", "v3", "v4", "v5"))


def num_tensorcores(kind=None):
    """v7x has 2 TensorCores per chip; earlier inference chips have 1."""
    kind = _device_kind() if kind is None else kind
    return 2 if any(t in kind for t in ("v7", "tpu7", "7x")) else 1


def _choose_row_tile(n, cap, num_tc):
    """8-aligned row tile.
    Single-TC chips: biggest tile that fits (fewest grid steps -> least per-step
    overhead).  Multi-TC (v7x): keep >= 4 grid steps so each core still gets a
    double-buffered pipeline."""
    n8 = max(8, ((n + 7) // 8) * 8)
    if num_tc <= 1:
        return min(cap, n8)
    target = max(256, ((n8 // 4 + 7) // 8) * 8)
    return max(8, min(cap, target, n8))


# ---------------------------------------------------------------------------
# Weight packing (do ONCE, outside the per-call path)
# ---------------------------------------------------------------------------
def _split_bf16(w):
    w = w.astype(jnp.float32)
    w_hi = w.astype(jnp.bfloat16)
    w_lo = (w - w_hi.astype(jnp.float32)).astype(jnp.bfloat16)
    return w_hi, w_lo


def pack_params(params, fuse_l2):
    (w1f, b1f, w2f, b2f, w1g, b1g, w2g, b2g, w1d, b1d, w2d, b2d) = [
        jnp.asarray(p, jnp.float32) for p in params]
    half = w1f.shape[1]  # hidden // 2

    # Fused first layer: block-diagonal (FORMULA_DIM, 2*half).
    w1 = jnp.zeros((FORMULA_DIM, 2 * half), jnp.float32)
    w1 = w1.at[:FORM_DIM, :half].set(w1f)
    w1 = w1.at[FORM_DIM:, half:].set(w1g)
    b1 = jnp.concatenate([b1f, b1g], axis=1)                   # (1, 2*half)

    w2d_hi, w2d_lo = _split_bf16(w2d)

    if fuse_l2:
        # Block-diag second encoder layer (256 x 256).
        w2 = jnp.zeros((2 * half, 2 * half), jnp.float32)
        w2 = w2.at[:half, :half].set(w2f)
        w2 = w2.at[half:, half:].set(w2g)
        b2 = jnp.concatenate([b2f, b2g], axis=1)                # (1, 2*half)
        w2_hi, w2_lo = _split_bf16(w2)
        # Fold the half-sum into the dense layer (K=256 is free on 256-wide MXU):
        # (h2[:, :half] + h2[:, half:]) @ W1d == h2 @ concat([W1d, W1d], axis=0)
        w1d_hi, w1d_lo = _split_bf16(jnp.concatenate([w1d, w1d], axis=0))
        return (w1, b1, w2_hi, w2_lo, b2,
                w1d_hi, w1d_lo, b1d, w2d_hi, w2d_lo, b2d)

    w2f_hi, w2f_lo = _split_bf16(w2f)
    w2g_hi, w2g_lo = _split_bf16(w2g)
    w1d_hi, w1d_lo = _split_bf16(w1d)
    return (w1, b1, w2f_hi, w2f_lo, b2f, w2g_hi, w2g_lo, b2g,
            w1d_hi, w1d_lo, b1d, w2d_hi, w2d_lo, b2d)


# ---------------------------------------------------------------------------
# Forward wrapper
# ---------------------------------------------------------------------------
def _resident_spec(arr):
    # Small weights/biases: whole array resident, same block every grid step.
    return pl.BlockSpec(arr.shape, lambda i, _nd=arr.ndim: (0,) * _nd)


@functools.partial(jax.jit, static_argnames=("fuse_l2", "row_tile_cap", "num_tc"))
def mlp_sum_agg_mlp(x, packed, *, fuse_l2, row_tile_cap=2048, num_tc=1):
    """x: (..., FORMULA_DIM) float32; packed = pack_params(params, fuse_l2).
    Returns (..., hidden) float32."""
    hidden = packed[-1].shape[1]          # b2d is (1, hidden)
    orig_shape = x.shape
    n = 1
    for s in orig_shape[:-1]:
        n *= s
    x2 = x.reshape(n, FORMULA_DIM).astype(jnp.float32)

    tile_n = _choose_row_tile(n, row_tile_cap, num_tc)
    # No padding / output slicing: Pallas handles the ragged last block
    # (OOB reads are confined to masked rows, OOB writes are dropped).
    grid = (pl.cdiv(n, tile_n),)

    kernel = _kernel_fused if fuse_l2 else _kernel_split
    in_specs = [pl.BlockSpec((tile_n, FORMULA_DIM), lambda i: (i, 0))]
    in_specs += [_resident_spec(p) for p in packed]

    out = pl.pallas_call(
        kernel,
        out_shape=jax.ShapeDtypeStruct((n, hidden), jnp.float32),
        grid_spec=pltpu.PrefetchScalarGridSpec(
            num_scalar_prefetch=0,
            grid=grid,
            in_specs=in_specs,
            out_specs=pl.BlockSpec((tile_n, hidden), lambda i: (i, 0)),
        ),
        compiler_params=pltpu.CompilerParams(
            dimension_semantics=("parallel",),
            vmem_limit_bytes=48 * 1024 * 1024,
        ),
    )(x2, *packed)

    return out.reshape(*orig_shape[:-1], hidden)


# ---------------------------------------------------------------------------
# Params + pure-JAX reference
# ---------------------------------------------------------------------------
def init_params(key, hidden_size=HIDDEN_SIZE):
    """Deterministic init. Weights stored as (in, out); PyTorch Linear does x @ W.T + b."""
    h = hidden_size
    half = h // 2
    ks = jax.random.split(key, 12)

    def w(k, fan_in, fan_out):
        bound = 1.0 / (fan_in ** 0.5)
        return jax.random.uniform(k, (fan_in, fan_out), jnp.float32, -bound, bound)

    def b(k, fan_in, fan_out):
        bound = 1.0 / (fan_in ** 0.5)
        return jax.random.uniform(k, (1, fan_out), jnp.float32, -bound, bound)

    w1f, b1f = w(ks[0], FORM_DIM, half), b(ks[1], FORM_DIM, half)
    w2f, b2f = w(ks[2], half, half),     b(ks[3], half, half)
    w1g, b1g = w(ks[4], GLOB_DIM, half), b(ks[5], GLOB_DIM, half)
    w2g, b2g = w(ks[6], half, half),     b(ks[7], half, half)
    w1d, b1d = w(ks[8], half, h),        b(ks[9], half, h)
    w2d, b2d = w(ks[10], h, h),          b(ks[11], h, h)

    return (w1f, b1f, w2f, b2f, w1g, b1g, w2g, b2g, w1d, b1d, w2d, b2d)


def reference_forward(x, params):
    """Pure-JAX reference with pinned f32 (HIGHEST) matmul precision."""
    (w1f, b1f, w2f, b2f, w1g, b1g, w2g, b2g, w1d, b1d, w2d, b2d) = params
    dot = lambda a, b: jnp.dot(a, b, precision=jax.lax.Precision.HIGHEST)
    form = jnp.maximum(dot(x[..., :FORM_DIM], w1f) + b1f[0], 0.0)
    form = jnp.maximum(dot(form, w2f) + b2f[0], 0.0)
    glob = jnp.maximum(dot(x[..., FORM_DIM:], w1g) + b1g[0], 0.0)
    glob = jnp.maximum(dot(glob, w2g) + b2g[0], 0.0)
    z = form + glob
    d = jnp.maximum(dot(z, w1d) + b1d[0], 0.0)
    d = jnp.maximum(dot(d, w2d) + b2d[0], 0.0)
    return d


if __name__ == "__main__":
    key = jax.random.PRNGKey(0)
    k_x, k_p = jax.random.split(key)
    params = init_params(k_p)

    kind = _device_kind()
    fuse_l2 = default_fuse_l2(kind)
    num_tc = num_tensorcores(kind)

    # Pack once (hoisted out of the per-call path).
    packed = pack_params(params, fuse_l2)
    packed_alt = pack_params(params, not fuse_l2)

    # Small input: (batch=2, seq=8, formula_dim=21) -> 16 rows.
    x = jax.random.normal(k_x, (2, 8, FORMULA_DIM), jnp.float32)
    out = jax.block_until_ready(
        mlp_sum_agg_mlp(x, packed, fuse_l2=fuse_l2, num_tc=num_tc))
    ref = reference_forward(x, params)
    assert out.shape == (2, 8, HIDDEN_SIZE), out.shape
    assert jnp.allclose(out, ref, atol=2e-4, rtol=2e-4), "mismatch vs reference (small)"

    # Non-default kernel path (both variants must compile & match on any chip).
    out_alt = jax.block_until_ready(
        mlp_sum_agg_mlp(x, packed_alt, fuse_l2=not fuse_l2, num_tc=num_tc))
    assert jnp.allclose(out_alt, ref, atol=2e-4, rtol=2e-4), "mismatch vs reference (alt path)"

    # Odd row count (3*37 = 111 rows) exercises the ragged last block (no pad/slice),
    # and a small tile cap forces a multi-step grid through the same path.
    x_odd = jax.random.normal(k_x, (3, 37, FORMULA_DIM), jnp.float32)
    ref_odd = reference_forward(x_odd, params)
    out_odd = jax.block_until_ready(
        mlp_sum_agg_mlp(x_odd, packed, fuse_l2=fuse_l2, num_tc=num_tc))
    assert jnp.allclose(out_odd, ref_odd, atol=2e-4, rtol=2e-4), "mismatch vs reference (odd)"
    out_odd_multi = jax.block_until_ready(
        mlp_sum_agg_mlp(x_odd, packed, fuse_l2=fuse_l2, num_tc=num_tc, row_tile_cap=64))
    assert jnp.allclose(out_odd_multi, ref_odd, atol=2e-4, rtol=2e-4), \
        "mismatch vs reference (odd, multi-step grid)"

    print("KERNEL_OK")
</pallas_src>

<mosaic_0001>
module attributes {stable_mosaic.version = 11 : i64} {
  func.func @_kernel_fused(%arg0: i32, %arg1: memref<16x21xf32, #tpu.memory_space<vmem>>, %arg2: memref<21x256xf32, #tpu.memory_space<vmem>>, %arg3: memref<1x256xf32, #tpu.memory_space<vmem>>, %arg4: memref<256x256xbf16, #tpu.memory_space<vmem>>, %arg5: memref<256x256xbf16, #tpu.memory_space<vmem>>, %arg6: memref<1x256xf32, #tpu.memory_space<vmem>>, %arg7: memref<256x256xbf16, #tpu.memory_space<vmem>>, %arg8: memref<256x256xbf16, #tpu.memory_space<vmem>>, %arg9: memref<1x256xf32, #tpu.memory_space<vmem>>, %arg10: memref<256x256xbf16, #tpu.memory_space<vmem>>, %arg11: memref<256x256xbf16, #tpu.memory_space<vmem>>, %arg12: memref<1x256xf32, #tpu.memory_space<vmem>>, %arg13: memref<16x256xf32, #tpu.memory_space<vmem>>) attributes {dimension_semantics = [#tpu.dimension_semantics<parallel>], iteration_bounds = array<i64: 1>, scalar_prefetch = 0 : i64, scratch_operands = 0 : i64, tpu.core_type = #tpu.core_type<tc>, window_params = [{transform_indices = @transform_0, window_bounds = array<i64: 16, 21>}, {pipeline_mode = #tpu.pipeline_mode<synchronous>, transform_indices = @transform_1, window_bounds = array<i64: 21, 256>}, {pipeline_mode = #tpu.pipeline_mode<synchronous>, transform_indices = @transform_2, window_bounds = array<i64: 1, 256>}, {pipeline_mode = #tpu.pipeline_mode<synchronous>, transform_indices = @transform_3, window_bounds = array<i64: 256, 256>}, {pipeline_mode = #tpu.pipeline_mode<synchronous>, transform_indices = @transform_4, window_bounds = array<i64: 256, 256>}, {pipeline_mode = #tpu.pipeline_mode<synchronous>, transform_indices = @transform_5, window_bounds = array<i64: 1, 256>}, {pipeline_mode = #tpu.pipeline_mode<synchronous>, transform_indices = @transform_6, window_bounds = array<i64: 256, 256>}, {pipeline_mode = #tpu.pipeline_mode<synchronous>, transform_indices = @transform_7, window_bounds = array<i64: 256, 256>}, {pipeline_mode = #tpu.pipeline_mode<synchronous>, transform_indices = @transform_8, window_bounds = array<i64: 1, 256>}, {pipeline_mode = #tpu.pipeline_mode<synchronous>, transform_indices = @transform_9, window_bounds = array<i64: 256, 256>}, {pipeline_mode = #tpu.pipeline_mode<synchronous>, transform_indices = @transform_10, window_bounds = array<i64: 256, 256>}, {pipeline_mode = #tpu.pipeline_mode<synchronous>, transform_indices = @transform_11, window_bounds = array<i64: 1, 256>}, {transform_indices = @transform_12, window_bounds = array<i64: 16, 256>}]} {
    %c0 = arith.constant 0 : index
    %c0_0 = arith.constant 0 : index
    %0 = vector.load %arg1[%c0, %c0_0] : memref<16x21xf32, #tpu.memory_space<vmem>>, vector<16x21xf32>
    %c0_1 = arith.constant 0 : index
    %c0_2 = arith.constant 0 : index
    %1 = vector.load %arg2[%c0_1, %c0_2] : memref<21x256xf32, #tpu.memory_space<vmem>>, vector<21x256xf32>
    %cst = arith.constant dense<0.000000e+00> : vector<16x256xf32>
    %2 = tpu.matmul %0, %1, %cst {dimension_numbers = #tpu.dot_dimension_numbers<[1], [0], [0], [1], [0, 0, 1, 1], [], []>, precision = #tpu.contract_precision<fp32>} : vector<16x21xf32>, vector<21x256xf32>, vector<16x256xf32> -> vector<16x256xf32>
    %c0_3 = arith.constant 0 : index
    %c0_4 = arith.constant 0 : index
    %3 = vector.load %arg3[%c0_3, %c0_4] : memref<1x256xf32, #tpu.memory_space<vmem>>, vector<1x256xf32>
    %4 = vector.broadcast %3 : vector<1x256xf32> to vector<16x256xf32>
    %5 = arith.addf %2, %4 : vector<16x256xf32>
    %cst_5 = arith.constant 0.000000e+00 : f32
    %6 = vector.broadcast %cst_5 : f32 to vector<16x256xf32>
    %7 = arith.maximumf %5, %6 : vector<16x256xf32>
    %c0_6 = arith.constant 0 : index
    %c0_7 = arith.constant 0 : index
    %8 = vector.load %arg4[%c0_6, %c0_7] : memref<256x256xbf16, #tpu.memory_space<vmem>>, vector<256x256xbf16>
    %c0_8 = arith.constant 0 : index
    %c0_9 = arith.constant 0 : index
    %9 = vector.load %arg5[%c0_8, %c0_9] : memref<256x256xbf16, #tpu.memory_space<vmem>>, vector<256x256xbf16>
    %10 = arith.truncf %7 : vector<16x256xf32> to vector<16x256xbf16>
    %11 = arith.extf %10 : vector<16x256xbf16> to vector<16x256xf32>
    %12 = arith.subf %7, %11 : vector<16x256xf32>
    %13 = arith.truncf %12 : vector<16x256xf32> to vector<16x256xbf16>
    %cst_10 = arith.constant dense<0.000000e+00> : vector<16x256xf32>
    %14 = tpu.matmul %10, %8, %cst_10 {dimension_numbers = #tpu.dot_dimension_numbers<[1], [0], [0], [1], [0, 0, 1, 1], [], []>} : vector<16x256xbf16>, vector<256x256xbf16>, vector<16x256xf32> -> vector<16x256xf32>
    %cst_11 = arith.constant dense<0.000000e+00> : vector<16x256xf32>
    %15 = tpu.matmul %13, %8, %cst_11 {dimension_numbers = #tpu.dot_dimension_numbers<[1], [0], [0], [1], [0, 0, 1, 1], [], []>} : vector<16x256xbf16>, vector<256x256xbf16>, vector<16x256xf32> -> vector<16x256xf32>
    %16 = arith.addf %14, %15 : vector<16x256xf32>
    %cst_12 = arith.constant dense<0.000000e+00> : vector<16x256xf32>
    %17 = tpu.matmul %10, %9, %cst_12 {dimension_numbers = #tpu.dot_dimension_numbers<[1], [0], [0], [1], [0, 0, 1, 1], [], []>} : vector<16x256xbf16>, vector<256x256xbf16>, vector<16x256xf32> -> vector<16x256xf32>
    %18 = arith.addf %16, %17 : vector<16x256xf32>
    %c0_13 = arith.constant 0 : index
    %c0_14 = arith.constant 0 : index
    %19 = vector.load %arg6[%c0_13, %c0_14] : memref<1x256xf32, #tpu.memory_space<vmem>>, vector<1x256xf32>
    %20 = vector.broadcast %19 : vector<1x256xf32> to vector<16x256xf32>
    %21 = arith.addf %18, %20 : vector<16x256xf32>
    %cst_15 = arith.constant 0.000000e+00 : f32
    %22 = vector.broadcast %cst_15 : f32 to vector<16x256xf32>
    %23 = arith.maximumf %21, %22 : vector<16x256xf32>
    %c0_16 = arith.constant 0 : index
    %c0_17 = arith.constant 0 : index
    %24 = vector.load %arg7[%c0_16, %c0_17] : memref<256x256xbf16, #tpu.memory_space<vmem>>, vector<256x256xbf16>
    %c0_18 = arith.constant 0 : index
    %c0_19 = arith.constant 0 : index
    %25 = vector.load %arg8[%c0_18, %c0_19] : memref<256x256xbf16, #tpu.memory_space<vmem>>, vector<256x256xbf16>
    %26 = arith.truncf %23 : vector<16x256xf32> to vector<16x256xbf16>
    %27 = arith.extf %26 : vector<16x256xbf16> to vector<16x256xf32>
    %28 = arith.subf %23, %27 : vector<16x256xf32>
    %29 = arith.truncf %28 : vector<16x256xf32> to vector<16x256xbf16>
    %cst_20 = arith.constant dense<0.000000e+00> : vector<16x256xf32>
    %30 = tpu.matmul %26, %24, %cst_20 {dimension_numbers = #tpu.dot_dimension_numbers<[1], [0], [0], [1], [0, 0, 1, 1], [], []>} : vector<16x256xbf16>, vector<256x256xbf16>, vector<16x256xf32> -> vector<16x256xf32>
    %cst_21 = arith.constant dense<0.000000e+00> : vector<16x256xf32>
    %31 = tpu.matmul %29, %24, %cst_21 {dimension_numbers = #tpu.dot_dimension_numbers<[1], [0], [0], [1], [0, 0, 1, 1], [], []>} : vector<16x256xbf16>, vector<256x256xbf16>, vector<16x256xf32> -> vector<16x256xf32>
    %32 = arith.addf %30, %31 : vector<16x256xf32>
    %cst_22 = arith.constant dense<0.000000e+00> : vector<16x256xf32>
    %33 = tpu.matmul %26, %25, %cst_22 {dimension_numbers = #tpu.dot_dimension_numbers<[1], [0], [0], [1], [0, 0, 1, 1], [], []>} : vector<16x256xbf16>, vector<256x256xbf16>, vector<16x256xf32> -> vector<16x256xf32>
    %34 = arith.addf %32, %33 : vector<16x256xf32>
    %c0_23 = arith.constant 0 : index
    %c0_24 = arith.constant 0 : index
    %35 = vector.load %arg9[%c0_23, %c0_24] : memref<1x256xf32, #tpu.memory_space<vmem>>, vector<1x256xf32>
    %36 = vector.broadcast %35 : vector<1x256xf32> to vector<16x256xf32>
    %37 = arith.addf %34, %36 : vector<16x256xf32>
    %cst_25 = arith.constant 0.000000e+00 : f32
    %38 = vector.broadcast %cst_25 : f32 to vector<16x256xf32>
    %39 = arith.maximumf %37, %38 : vector<16x256xf32>
    %c0_26 = arith.constant 0 : index
    %c0_27 = arith.constant 0 : index
    %40 = vector.load %arg10[%c0_26, %c0_27] : memref<256x256xbf16, #tpu.memory_space<vmem>>, vector<256x256xbf16>
    %c0_28 = arith.constant 0 : index
    %c0_29 = arith.constant 0 : index
    %41 = vector.load %arg11[%c0_28, %c0_29] : memref<256x256xbf16, #tpu.memory_space<vmem>>, vector<256x256xbf16>
    %42 = arith.truncf %39 : vector<16x256xf32> to vector<16x256xbf16>
    %43 = arith.extf %42 : vector<16x256xbf16> to vector<16x256xf32>
    %44 = arith.subf %39, %43 : vector<16x256xf32>
    %45 = arith.truncf %44 : vector<16x256xf32> to vector<16x256xbf16>
    %cst_30 = arith.constant dense<0.000000e+00> : vector<16x256xf32>
    %46 = tpu.matmul %42, %40, %cst_30 {dimension_numbers = #tpu.dot_dimension_numbers<[1], [0], [0], [1], [0, 0, 1, 1], [], []>} : vector<16x256xbf16>, vector<256x256xbf16>, vector<16x256xf32> -> vector<16x256xf32>
    %cst_31 = arith.constant dense<0.000000e+00> : vector<16x256xf32>
    %47 = tpu.matmul %45, %40, %cst_31 {dimension_numbers = #tpu.dot_dimension_numbers<[1], [0], [0], [1], [0, 0, 1, 1], [], []>} : vector<16x256xbf16>, vector<256x256xbf16>, vector<16x256xf32> -> vector<16x256xf32>
    %48 = arith.addf %46, %47 : vector<16x256xf32>
    %cst_32 = arith.constant dense<0.000000e+00> : vector<16x256xf32>
    %49 = tpu.matmul %42, %41, %cst_32 {dimension_numbers = #tpu.dot_dimension_numbers<[1], [0], [0], [1], [0, 0, 1, 1], [], []>} : vector<16x256xbf16>, vector<256x256xbf16>, vector<16x256xf32> -> vector<16x256xf32>
    %50 = arith.addf %48, %49 : vector<16x256xf32>
    %c0_33 = arith.constant 0 : index
    %c0_34 = arith.constant 0 : index
    %51 = vector.load %arg12[%c0_33, %c0_34] : memref<1x256xf32, #tpu.memory_space<vmem>>, vector<1x256xf32>
    %52 = vector.broadcast %51 : vector<1x256xf32> to vector<16x256xf32>
    %53 = arith.addf %50, %52 : vector<16x256xf32>
    %cst_35 = arith.constant 0.000000e+00 : f32
    %54 = vector.broadcast %cst_35 : f32 to vector<16x256xf32>
    %55 = arith.maximumf %53, %54 : vector<16x256xf32>
    %c0_36 = arith.constant 0 : index
    %c0_37 = arith.constant 0 : index
    %56 = vector.load %arg13[%c0_36, %c0_37] : memref<16x256xf32, #tpu.memory_space<vmem>>, vector<16x256xf32>
    tpu.vector_store %arg13[%c0_36, %c0_37], %55 {strides = array<i32>} : memref<16x256xf32, #tpu.memory_space<vmem>>, vector<16x256xf32>,
    return
  }
  func.func @transform_0(%arg0: i32) -> (i32, i32) {
    %c0_i32 = arith.constant 0 : i32
    %c0_i32_0 = arith.constant 0 : i32
    return %arg0, %c0_i32 : i32, i32
  }
  func.func @transform_1(%arg0: i32) -> (i32, i32) {
    %c0_i32 = arith.constant 0 : i32
    %c0_i32_0 = arith.constant 0 : i32
    %c0_i32_1 = arith.constant 0 : i32
    return %c0_i32, %c0_i32_0 : i32, i32
  }
  func.func @transform_2(%arg0: i32) -> (i32, i32) {
    %c0_i32 = arith.constant 0 : i32
    %c0_i32_0 = arith.constant 0 : i32
    %c0_i32_1 = arith.constant 0 : i32
    return %c0_i32, %c0_i32_0 : i32, i32
  }
  func.func @transform_3(%arg0: i32) -> (i32, i32) {
    %c0_i32 = arith.constant 0 : i32
    %c0_i32_0 = arith.constant 0 : i32
    %c0_i32_1 = arith.constant 0 : i32
    return %c0_i32, %c0_i32_0 : i32, i32
  }
  func.func @transform_4(%arg0: i32) -> (i32, i32) {
    %c0_i32 = arith.constant 0 : i32
    %c0_i32_0 = arith.constant 0 : i32
    %c0_i32_1 = arith.constant 0 : i32
    return %c0_i32, %c0_i32_0 : i32, i32
  }
  func.func @transform_5(%arg0: i32) -> (i32, i32) {
    %c0_i32 = arith.constant 0 : i32
    %c0_i32_0 = arith.constant 0 : i32
    %c0_i32_1 = arith.constant 0 : i32
    return %c0_i32, %c0_i32_0 : i32, i32
  }
  func.func @transform_6(%arg0: i32) -> (i32, i32) {
    %c0_i32 = arith.constant 0 : i32
    %c0_i32_0 = arith.constant 0 : i32
    %c0_i32_1 = arith.constant 0 : i32
    return %c0_i32, %c0_i32_0 : i32, i32
  }
  func.func @transform_7(%arg0: i32) -> (i32, i32) {
    %c0_i32 = arith.constant 0 : i32
    %c0_i32_0 = arith.constant 0 : i32
    %c0_i32_1 = arith.constant 0 : i32
    return %c0_i32, %c0_i32_0 : i32, i32
  }
  func.func @transform_8(%arg0: i32) -> (i32, i32) {
    %c0_i32 = arith.constant 0 : i32
    %c0_i32_0 = arith.constant 0 : i32
    %c0_i32_1 = arith.constant 0 : i32
    return %c0_i32, %c0_i32_0 : i32, i32
  }
  func.func @transform_9(%arg0: i32) -> (i32, i32) {
    %c0_i32 = arith.constant 0 : i32
    %c0_i32_0 = arith.constant 0 : i32
    %c0_i32_1 = arith.constant 0 : i32
    return %c0_i32, %c0_i32_0 : i32, i32
  }
  func.func @transform_10(%arg0: i32) -> (i32, i32) {
    %c0_i32 = arith.constant 0 : i32
    %c0_i32_0 = arith.constant 0 : i32
    %c0_i32_1 = arith.constant 0 : i32
    return %c0_i32, %c0_i32_0 : i32, i32
  }
  func.func @transform_11(%arg0: i32) -> (i32, i32) {
    %c0_i32 = arith.constant 0 : i32
    %c0_i32_0 = arith.constant 0 : i32
    %c0_i32_1 = arith.constant 0 : i32
    return %c0_i32, %c0_i32_0 : i32, i32
  }
  func.func @transform_12(%arg0: i32) -> (i32, i32) {
    %c0_i32 = arith.constant 0 : i32
    %c0_i32_0 = arith.constant 0 : i32
    return %arg0, %c0_i32 : i32, i32
  }
}

</mosaic_0001>

<llo_original>
// kernel: mlp_sum_agg_mlp.1
$region0: #{mlp_sum_agg_mlp.1}
  #allocation0 [shape = 'u32[]', space=smem, size = 0x4, offset = 0x4, fixed_abs, tag = 'smem constant byte address 0x4 - core index']
  #allocation1 [shape = 'u32[144,128]{1,0:T(1,128)}', space=vmem, size = 0x12000, scoped, tag = 'internal scratch']
  %s0 = inlined_call_operand.hbm [shape: f32[16,21], index: 0, kind: input, shape index: {}]
  %s1 = inlined_call_operand.hbm [shape: f32[21,256], index: 1, kind: input, shape index: {}]
  %s2 = inlined_call_operand.vmem [shape: f32[1,256], index: 2, kind: input, shape index: {}]
  %s3 = inlined_call_operand.hbm [shape: bf16[256,256], index: 3, kind: input, shape index: {}]
  %s4 = inlined_call_operand.hbm [shape: bf16[256,256], index: 4, kind: input, shape index: {}]
  %s5 = inlined_call_operand.vmem [shape: f32[1,256], index: 5, kind: input, shape index: {}]
  %s6 = inlined_call_operand.hbm [shape: bf16[256,256], index: 6, kind: input, shape index: {}]
  %s7 = inlined_call_operand.hbm [shape: bf16[256,256], index: 7, kind: input, shape index: {}]
  %s8 = inlined_call_operand.vmem [shape: f32[1,256], index: 8, kind: input, shape index: {}]
  %s9 = inlined_call_operand.hbm [shape: bf16[256,256], index: 9, kind: input, shape index: {}]
  %s10 = inlined_call_operand.hbm [shape: bf16[256,256], index: 10, kind: input, shape index: {}]
  %s11 = inlined_call_operand.vmem [shape: f32[1,256], index: 11, kind: input, shape index: {}]
  %s12 = inlined_call_operand.hbm [shape: f32[16,256], index: 12, kind: output, shape index: {}]
  %s13 = sld [smem:[#allocation0]]
  $region90: #{mlp_sum_agg_mlp.1} parent=0
    _
  %s15 = ssub.s32 1, %s13
  %s16 = scalar_select 0, %s15, %s13
  $region1: #{mlp_sum_agg_mlp.1} parent=0
    #allocation2 [shape = 'u8[8192]{0}', space=vmem, size = 0x2000, scoped, tag = 'input window, operand 0, single buffered']
    #allocation3 [shape = 's32[1]{0}', space=sflag, size = 0x4, scoped, tag = 'scoped memory for mlp_sum_agg_mlp.1']
    #allocation4 [shape = 's32[1]{0}', space=sflag, size = 0x4, scoped, tag = 'scoped memory for mlp_sum_agg_mlp.1']
    #allocation5 [shape = 'u8[24576]{0}', space=vmem, size = 0x6000, scoped, tag = 'input window, operand 1, single buffered']
    #allocation6 [shape = 's32[1]{0}', space=sflag, size = 0x4, scoped, tag = 'scoped memory for mlp_sum_agg_mlp.1']
    #allocation7 [shape = 'u8[131072]{0}', space=vmem, size = 0x20000, scoped, tag = 'input window, operand 3, single buffered']
    #allocation8 [shape = 'u8[131072]{0}', space=vmem, size = 0x20000, scoped, tag = 'input window, operand 4, single buffered']
    #allocation9 [shape = 's32[1]{0}', space=sflag, size = 0x4, scoped, tag = 'scoped memory for mlp_sum_agg_mlp.1']
    #allocation10 [shape = 'u8[131072]{0}', space=vmem, size = 0x20000, scoped, tag = 'input window, operand 6, single buffered']
    #allocation11 [shape = 'u8[131072]{0}', space=vmem, size = 0x20000, scoped, tag = 'input window, operand 7, single buffered']
    #allocation12 [shape = 's32[1]{0}', space=sflag, size = 0x4, scoped, tag = 'scoped memory for mlp_sum_agg_mlp.1']
    #allocation13 [shape = 'u8[131072]{0}', space=vmem, size = 0x20000, scoped, tag = 'input window, operand 9, single buffered']
    #allocation14 [shape = 'u8[131072]{0}', space=vmem, size = 0x20000, scoped, tag = 'input window, operand 10, single buffered']
    #allocation15 [shape = 's32[1]{0}', space=sflag, size = 0x4, scoped, tag = 'scoped memory for mlp_sum_agg_mlp.1']
    #allocation16 [shape = 'u8[16384]{0}', space=vmem, size = 0x4000, scoped, tag = 'output window, operand 0, single buffered']
    %17 = vsyncpa [#allocation3], 0
    %18 = vsyncpa [#allocation6], 0
    %19 = vsyncpa [#allocation9], 0
    %20 = vsyncpa [#allocation12], 0
    %21 = vsyncpa [#allocation15], 0
    %22 = vsyncpa [#allocation4], 0
    // Predicated region
    $region2: #{mlp_sum_agg_mlp.1} parent=1 // pred_check
      _
    $region3: #{mlp_sum_agg_mlp.1} parent=1 // pred_check_branch
      %24 = sbr.rel (0) target = $region5
    $region4: #{mlp_sum_agg_mlp.1} parent=1 // pred_region
      %s26 = ssub.s32 256, 256
      %27 = vsyncadd [#allocation3], %s26
      %s28 = sshll.u32 [#allocation2], 4
      %s29 = int_to_ptr.vmem [resolvable:$true] %s28
      %34 = dma.hbm_to_vmem [thread:$0]  %s0, 256, %s29, [#allocation3], 128, 128, 8
    $region5: #{mlp_sum_agg_mlp.1} parent=1 // pred_fallthru
      _
    // Predicated region
    $region6: #{mlp_sum_agg_mlp.1} parent=1 // pred_check
      _
    $region7: #{mlp_sum_agg_mlp.1} parent=1 // pred_check_branch
      %36 = sbr.rel (0) target = $region9
    $region8: #{mlp_sum_agg_mlp.1} parent=1 // pred_region
      %s38 = ssub.s32 768, 768
      %39 = vsyncadd [#allocation6], %s38
      %s40 = sshll.u32 [#allocation5], 4
      %s41 = int_to_ptr.vmem [resolvable:$true] %s40
      %46 = dma.hbm_to_vmem [thread:$0]  %s1, 768, %s41, [#allocation6], 256, 256, 16
    $region9: #{mlp_sum_agg_mlp.1} parent=1 // pred_fallthru
      _
    // Predicated region
    $region10: #{mlp_sum_agg_mlp.1} parent=1 // pred_check
      _
    $region11: #{mlp_sum_agg_mlp.1} parent=1 // pred_check_branch
      %48 = sbr.rel (0) target = $region13
    $region12: #{mlp_sum_agg_mlp.1} parent=1 // pred_region
      _
    $region13: #{mlp_sum_agg_mlp.1} parent=1 // pred_fallthru
      _
    // Predicated region
    $region14: #{mlp_sum_agg_mlp.1} parent=1 // pred_check
      _
    $region15: #{mlp_sum_agg_mlp.1} parent=1 // pred_check_branch
      %50 = sbr.rel (0) target = $region17
    $region16: #{mlp_sum_agg_mlp.1} parent=1 // pred_region
      %s52 = ssub.s32 4096, 4096
      %53 = vsyncadd [#allocation6], %s52
      %s54 = sshll.u32 [#allocation7], 4
      %s55 = int_to_ptr.vmem [resolvable:$true] %s54
      %60 = dma.hbm_to_vmem [thread:$0]  %s3, 4096, %s55, [#allocation6], 128, 128, 8
    $region17: #{mlp_sum_agg_mlp.1} parent=1 // pred_fallthru
      _
    // Predicated region
    $region18: #{mlp_sum_agg_mlp.1} parent=1 // pred_check
      _
    $region19: #{mlp_sum_agg_mlp.1} parent=1 // pred_check_branch
      %62 = sbr.rel (0) target = $region21
    $region20: #{mlp_sum_agg_mlp.1} parent=1 // pred_region
      %s64 = ssub.s32 4096, 4096
      %65 = vsyncadd [#allocation9], %s64
      %s66 = sshll.u32 [#allocation8], 4
      %s67 = int_to_ptr.vmem [resolvable:$true] %s66
      %72 = dma.hbm_to_vmem [thread:$0]  %s4, 4096, %s67, [#allocation9], 128, 128, 8
    $region21: #{mlp_sum_agg_mlp.1} parent=1 // pred_fallthru
      _
    // Predicated region
    $region22: #{mlp_sum_agg_mlp.1} parent=1 // pred_check
      _
    $region23: #{mlp_sum_agg_mlp.1} parent=1 // pred_check_branch
      %74 = sbr.rel (0) target = $region25
    $region24: #{mlp_sum_agg_mlp.1} parent=1 // pred_region
      _
    $region25: #{mlp_sum_agg_mlp.1} parent=1 // pred_fallthru
      _
    // Predicated region
    $region26: #{mlp_sum_agg_mlp.1} parent=1 // pred_check
      _
    $region27: #{mlp_sum_agg_mlp.1} parent=1 // pred_check_branch
      %76 = sbr.rel (0) target = $region29
    $region28: #{mlp_sum_agg_mlp.1} parent=1 // pred_region
      %s78 = ssub.s32 4096, 4096
      %79 = vsyncadd [#allocation9], %s78
      %s80 = sshll.u32 [#allocation10], 4
      %s81 = int_to_ptr.vmem [resolvable:$true] %s80
      %86 = dma.hbm_to_vmem [thread:$0]  %s6, 4096, %s81, [#allocation9], 128, 128, 8
    $region29: #{mlp_sum_agg_mlp.1} parent=1 // pred_fallthru
      _
    // Predicated region
    $region30: #{mlp_sum_agg_mlp.1} parent=1 // pred_check
      _
    $region31: #{mlp_sum_agg_mlp.1} parent=1 // pred_check_branch
      %88 = sbr.rel (0) target = $region33
    $region32: #{mlp_sum_agg_mlp.1} parent=1 // pred_region
      %s90 = ssub.s32 4096, 4096
      %91 = vsyncadd [#allocation12], %s90
      %s92 = sshll.u32 [#allocation11], 4
      %s93 = int_to_ptr.vmem [resolvable:$true] %s92
      %98 = dma.hbm_to_vmem [thread:$0]  %s7, 4096, %s93, [#allocation12], 128, 128, 8
    $region33: #{mlp_sum_agg_mlp.1} parent=1 // pred_fallthru
      _
    // Predicated region
    $region34: #{mlp_sum_agg_mlp.1} parent=1 // pred_check
      _
    $region35: #{mlp_sum_agg_mlp.1} parent=1 // pred_check_branch
      %100 = sbr.rel (0) target = $region37
    $region36: #{mlp_sum_agg_mlp.1} parent=1 // pred_region
      _
    $region37: #{mlp_sum_agg_mlp.1} parent=1 // pred_fallthru
      _
    // Predicated region
    $region38: #{mlp_sum_agg_mlp.1} parent=1 // pred_check
      _
    $region39: #{mlp_sum_agg_mlp.1} parent=1 // pred_check_branch
      %102 = sbr.rel (0) target = $region41
    $region40: #{mlp_sum_agg_mlp.1} parent=1 // pred_region
      %s104 = ssub.s32 4096, 4096
      %105 = vsyncadd [#allocation12], %s104
      %s106 = sshll.u32 [#allocation13], 4
      %s107 = int_to_ptr.vmem [resolvable:$true] %s106
      %112 = dma.hbm_to_vmem [thread:$0]  %s9, 4096, %s107, [#allocation12], 128, 128, 8
    $region41: #{mlp_sum_agg_mlp.1} parent=1 // pred_fallthru
      _
    // Predicated region
    $region42: #{mlp_sum_agg_mlp.1} parent=1 // pred_check
      _
    $region43: #{mlp_sum_agg_mlp.1} parent=1 // pred_check_branch
      %114 = sbr.rel (0) target = $region45
    $region44: #{mlp_sum_agg_mlp.1} parent=1 // pred_region
      %s116 = ssub.s32 4096, 4096
      %117 = vsyncadd [#allocation15], %s116
      %s118 = sshll.u32 [#allocation14], 4
      %s119 = int_to_ptr.vmem [resolvable:$true] %s118
      %124 = dma.hbm_to_vmem [thread:$0]  %s10, 4096, %s119, [#allocation15], 128, 128, 8
    $region45: #{mlp_sum_agg_mlp.1} parent=1 // pred_fallthru
      _
    // Predicated region
    $region46: #{mlp_sum_agg_mlp.1} parent=1 // pred_check
      _
    $region47: #{mlp_sum_agg_mlp.1} parent=1 // pred_check_branch
      %126 = sbr.rel (0) target = $region49
    $region48: #{mlp_sum_agg_mlp.1} parent=1 // pred_region
      _
    $region49: #{mlp_sum_agg_mlp.1} parent=1 // pred_fallthru
      _
    // Predicated region
    $region50: #{mlp_sum_agg_mlp.1} parent=1 // pred_check
      _
    $region51: #{mlp_sum_agg_mlp.1} parent=1 // pred_check_branch
      %128 = sbr.rel (0) target = $region53
    $region52: #{mlp_sum_agg_mlp.1} parent=1 // pred_region
      %129 = dma.done [#allocation3], 256
    $region53: #{mlp_sum_agg_mlp.1} parent=1 // pred_fallthru
      _
    // Predicated region
    $region54: #{mlp_sum_agg_mlp.1} parent=1 // pred_check
      _
    $region55: #{mlp_sum_agg_mlp.1} parent=1 // pred_check_branch
      %131 = sbr.rel (0) target = $region57
    $region56: #{mlp_sum_agg_mlp.1} parent=1 // pred_region
      %132 = dma.done [#allocation6], 768
    $region57: #{mlp_sum_agg_mlp.1} parent=1 // pred_fallthru
      _
    // Predicated region
    $region58: #{mlp_sum_agg_mlp.1} parent=1 // pred_check
      _
    $region59: #{mlp_sum_agg_mlp.1} parent=1 // pred_check_branch
      %134 = sbr.rel (0) target = $region61
    $region60: #{mlp_sum_agg_mlp.1} parent=1 // pred_region
      %135 = dma.done [#allocation6], 4096
    $region61: #{mlp_sum_agg_mlp.1} parent=1 // pred_fallthru
      _
    // Predicated region
    $region62: #{mlp_sum_agg_mlp.1} parent=1 // pred_check
      _
    $region63: #{mlp_sum_agg_mlp.1} parent=1 // pred_check_branch
      %137 = sbr.rel (0) target = $region65
    $region64: #{mlp_sum_agg_mlp.1} parent=1 // pred_region
      %138 = dma.done [#allocation9], 4096
    $region65: #{mlp_sum_agg_mlp.1} parent=1 // pred_fallthru
      _
    // Predicated region
    $region66: #{mlp_sum_agg_mlp.1} parent=1 // pred_check
      _
    $region67: #{mlp_sum_agg_mlp.1} parent=1 // pred_check_branch
      %140 = sbr.rel (0) target = $region69
    $region68: #{mlp_sum_agg_mlp.1} parent=1 // pred_region
      %141 = dma.done [#allocation9], 4096
    $region69: #{mlp_sum_agg_mlp.1} parent=1 // pred_fallthru
      _
    // Predicated region
    $region70: #{mlp_sum_agg_mlp.1} parent=1 // pred_check
      _
    $region71: #{mlp_sum_agg_mlp.1} parent=1 // pred_check_branch
      %143 = sbr.rel (0) target = $region73
    $region72: #{mlp_sum_agg_mlp.1} parent=1 // pred_region
      %144 = dma.done [#allocation12], 4096
    $region73: #{mlp_sum_agg_mlp.1} parent=1 // pred_fallthru
      _
    // Predicated region
    $region74: #{mlp_sum_agg_mlp.1} parent=1 // pred_check
      _
    $region75: #{mlp_sum_agg_mlp.1} parent=1 // pred_check_branch
      %146 = sbr.rel (0) target = $region77
    $region76: #{mlp_sum_agg_mlp.1} parent=1 // pred_region
      %147 = dma.done [#allocation12], 4096
    $region77: #{mlp_sum_agg_mlp.1} parent=1 // pred_fallthru
      _
    // Predicated region
    $region78: #{mlp_sum_agg_mlp.1} parent=1 // pred_check
      _
    $region79: #{mlp_sum_agg_mlp.1} parent=1 // pred_check_branch
      %149 = sbr.rel (0) target = $region81
    $region80: #{mlp_sum_agg_mlp.1} parent=1 // pred_region
      %150 = dma.done [#allocation15], 4096
    $region81: #{mlp_sum_agg_mlp.1} parent=1 // pred_fallthru
      _
    %v151 = vld [vmem:[#allocation2] sm:$0xff]
    %v152 = vld [vmem:[#allocation2 + $0x8] sm:$0xff]
    %v153 = vld [vmem:[#allocation5] sm:$0xff]
    %v154 = vld [vmem:[#allocation5 + $0x8] sm:$0xff]
    %v155 = vld [vmem:[#allocation5 + $0x10] sm:$0xff]
    %v156 = vld [vmem:[#allocation5 + $0x18] sm:$0xff]
    %v157 = vld [vmem:[#allocation5 + $0x20] sm:$0x1f]
    %v158 = vld [vmem:[#allocation5 + $0x28] sm:$0x1f]
    %v159 = vld [vmem:[%s2] sm:$0x3]
    %v161 = vlaneseq
    %v162 = vshrl.u32 %v161, 7
    %v163 = vsub.s32 0, %v162
    %v164 = vrot.slane %v159, %v163
    %v165 = vlaneseq
    %v166 = vshrl.u32 %v165, 7
    %v167 = vsub.s32 1, %v166
    %v168 = vrot.slane %v159, %v167
    %vm171 = vcmask 171008
    %v173 = vsel %vm171, %v151, 0
    %v176 = vsel %vm171, %v152, 0
    %vm178 = vcmask 1044480
    %v180 = vsel %vm178, %v157, 0
    %v183 = vsel %vm178, %v158, 0
    %185 = vmatprep.subr.mxu0 0.0
    %186 = vmatpush1.msra.mxu0 0.0
    %187 = vmatprep.subr.mxu0 0.0
    %188 = vmatpush1.msra.mxu0 0.0
    %189 = vmatprep.subr.mxu0 0.0
    %190 = vmatpush1.msra.mxu0 0.0
    %191 = vmatprep.subr.mxu0 0.0
    %192 = vmatpush1.msra.mxu0 0.0
    %193 = vmatprep.subr.mxu0 0.0
    %194 = vmatpush1.msra.mxu0 0.0
    %195 = vmatprep.subr.mxu0 0.0
    %196 = vmatpush1.msra.mxu0 0.0
    %197 = vmatprep.subr.mxu0 0.0
    %198 = vmatpush1.msra.mxu0 0.0
    %199 = vmatprep.subr.mxu0 0.0
    %200 = vmatpush1.msra.mxu0 0.0
    %201 = vmatprep.subr.mxu0 0.0
    %202 = vmatpush1.msra.mxu0 0.0
    %203 = vmatprep.subr.mxu0 0.0
    %204 = vmatpush1.msra.mxu0 0.0
    %205 = vmatprep.subr.mxu0 0.0
    %206 = vmatpush1.msra.mxu0 0.0
    %207 = vmatprep.subr.mxu0 0.0
    %208 = vmatpush1.msra.mxu0 0.0
    %209 = vmatprep.subr.mxu0 0.0
    %210 = vmatpush1.msra.mxu0 0.0
    %v211 = vand.u32 %v183, 4294901760
    %212 = vmatprep.subr.mxu0 %v211
    %v213 = vand.u32 %v180, 4294901760
    %214 = vmatpush1.msra.mxu0 %v213
    %v215 = vand.u32 %v156, 4294901760
    %216 = vmatprep.subr.mxu0 %v215
    %v217 = vand.u32 %v155, 4294901760
    %218 = vmatpush1.msra.mxu0 %v217
    %v219 = vand.u32 %v154, 4294901760
    %220 = vmatprep.subr.mxu0 %v219
    %v221 = vand.u32 %v153, 4294901760
    %222 = vmatpush1.msra.mxu0 %v221
    %223 = vmatprep.subr.mxu0 0.0
    %224 = vmatpush2.msra.mxu0 0.0
    %225 = vmatprep.subr.mxu0 0.0
    %226 = vmatpush2.msra.mxu0 0.0
    %227 = vmatprep.subr.mxu0 0.0
    %228 = vmatpush2.msra.mxu0 0.0
    %229 = vmatprep.subr.mxu0 0.0
    %230 = vmatpush2.msra.mxu0 0.0
    %231 = vmatprep.subr.mxu0 0.0
    %232 = vmatpush2.msra.mxu0 0.0
    %233 = vmatprep.subr.mxu0 0.0
    %234 = vmatpush2.msra.mxu0 0.0
    %235 = vmatprep.subr.mxu0 0.0
    %236 = vmatpush2.msra.mxu0 0.0
    %237 = vmatprep.subr.mxu0 0.0
    %238 = vmatpush2.msra.mxu0 0.0
    %239 = vmatprep.subr.mxu0 0.0
    %240 = vmatpush2.msra.mxu0 0.0
    %241 = vmatprep.subr.mxu0 0.0
    %242 = vmatpush2.msra.mxu0 0.0
    %243 = vmatprep.subr.mxu0 0.0
    %244 = vmatpush2.msra.mxu0 0.0
    %245 = vmatprep.subr.mxu0 0.0
    %246 = vmatpush2.msra.mxu0 0.0
    %247 = vmatprep.subr.mxu0 0.0
    %248 = vmatpush2.msra.mxu0 0.0
    %249 = vmatprep.subr.mxu0 0.0
    %250 = vmatpush2.msra.mxu0 0.0
    %251 = vmatprep.subr.mxu0 0.0
    %252 = vmatpush2.msra.mxu0 0.0
    %253 = vmatprep.subr.mxu0 0.0
    %254 = vmatpush2.msra.mxu0 0.0
    %255 = vmatprep.mubr.f32.mxu0 0.0
    %v256 = vand.u32 %v173, 4294901760
    %v257 = vsub.f32 %v173, %v256
    %v258 = vand.u32 %v257, 4294901760
    %v259 = vsub.f32 %v257, %v258
    %v260 = vand.u32 %v259, 4294901760
    %261 = vmatmul.mubr.f32.gmra.mxu0 %v260
    %v262 = vpop.f32.mrf.mxu0
    %v263 = vadd.f32 %v164, %v262
    %v264 = vpop.f32.mrf.mxu0
    %v265 = vadd.f32 %v168, %v264
    %266 = vmatprep.mubr.f32.mxu0 0.0
    %v267 = vand.u32 %v176, 4294901760
    %v268 = vsub.f32 %v176, %v267
    %v269 = vand.u32 %v268, 4294901760
    %v270 = vsub.f32 %v268, %v269
    %v271 = vand.u32 %v270, 4294901760
    %272 = vmatmul.mubr.f32.gmra.mxu0 %v271
    %v273 = vpop.f32.mrf.mxu0
    %v274 = vadd.f32 %v164, %v273
    %v275 = vpop.f32.mrf.mxu0
    %v276 = vadd.f32 %v168, %v275
    %277 = vdwg.mxu0
    %278 = vmatprep.subr.mxu0 0.0
    %279 = vmatpush1.msra.mxu0 0.0
    %280 = vmatprep.subr.mxu0 0.0
    %281 = vmatpush1.msra.mxu0 0.0
    %282 = vmatprep.subr.mxu0 0.0
    %283 = vmatpush1.msra.mxu0 0.0
    %284 = vmatprep.subr.mxu0 0.0
    %285 = vmatpush1.msra.mxu0 0.0
    %286 = vmatprep.subr.mxu0 0.0
    %287 = vmatpush1.msra.mxu0 0.0
    %288 = vmatprep.subr.mxu0 0.0
    %289 = vmatpush1.msra.mxu0 0.0
    %290 = vmatprep.subr.mxu0 0.0
    %291 = vmatpush1.msra.mxu0 0.0
    %292 = vmatprep.subr.mxu0 0.0
    %293 = vmatpush1.msra.mxu0 0.0
    %294 = vmatprep.subr.mxu0 0.0
    %295 = vmatpush1.msra.mxu0 0.0
    %296 = vmatprep.subr.mxu0 0.0
    %297 = vmatpush1.msra.mxu0 0.0
    %298 = vmatprep.subr.mxu0 0.0
    %299 = vmatpush1.msra.mxu0 0.0
    %300 = vmatprep.subr.mxu0 0.0
    %301 = vmatpush1.msra.mxu0 0.0
    %302 = vmatprep.subr.mxu0 0.0
    %303 = vmatpush1.msra.mxu0 0.0
    %v304 = vand.u32 %v183, 4294901760
    %v305 = vsub.f32 %v183, %v304
    %v306 = vand.u32 %v305, 4294901760
    %v307 = vsub.f32 %v305, %v306
    %v308 = vand.u32 %v307, 4294901760
    %309 = vmatprep.subr.mxu0 %v308
    %v310 = vand.u32 %v180, 4294901760
    %v311 = vsub.f32 %v180, %v310
    %v312 = vand.u32 %v311, 4294901760
    %v313 = vsub.f32 %v311, %v312
    %v314 = vand.u32 %v313, 4294901760
    %315 = vmatpush1.msra.mxu0 %v314
    %v316 = vand.u32 %v156, 4294901760
    %v317 = vsub.f32 %v156, %v316
    %v318 = vand.u32 %v317, 4294901760
    %v319 = vsub.f32 %v317, %v318
    %v320 = vand.u32 %v319, 4294901760
    %321 = vmatprep.subr.mxu0 %v320
    %v322 = vand.u32 %v155, 4294901760
    %v323 = vsub.f32 %v155, %v322
    %v324 = vand.u32 %v323, 4294901760
    %v325 = vsub.f32 %v323, %v324
    %v326 = vand.u32 %v325, 4294901760
    %327 = vmatpush1.msra.mxu0 %v326
    %v328 = vand.u32 %v154, 4294901760
    %v329 = vsub.f32 %v154, %v328
    %v330 = vand.u32 %v329, 4294901760
    %v331 = vsub.f32 %v329, %v330
    %v332 = vand.u32 %v331, 4294901760
    %333 = vmatprep.subr.mxu0 %v332
    %v334 = vand.u32 %v153, 4294901760
    %v335 = vsub.f32 %v153, %v334
    %v336 = vand.u32 %v335, 4294901760
    %v337 = vsub.f32 %v335, %v336
    %v338 = vand.u32 %v337, 4294901760
    %339 = vmatpush1.msra.mxu0 %v338
    %340 = vmatprep.subr.mxu0 0.0
    %341 = vmatpush2.msra.mxu0 0.0
    %342 = vmatprep.subr.mxu0 0.0
    %343 = vmatpush2.msra.mxu0 0.0
    %344 = vmatprep.subr.mxu0 0.0
    %345 = vmatpush2.msra.mxu0 0.0
    %346 = vmatprep.subr.mxu0 0.0
    %347 = vmatpush2.msra.mxu0 0.0
    %348 = vmatprep.subr.mxu0 0.0
    %349 = vmatpush2.msra.mxu0 0.0
    %350 = vmatprep.subr.mxu0 0.0
    %351 = vmatpush2.msra.mxu0 0.0
    %352 = vmatprep.subr.mxu0 0.0
    %353 = vmatpush2.msra.mxu0 0.0
    %354 = vmatprep.subr.mxu0 0.0
    %355 = vmatpush2.msra.mxu0 0.0
    %356 = vmatprep.subr.mxu0 0.0
    %357 = vmatpush2.msra.mxu0 0.0
    %358 = vmatprep.subr.mxu0 0.0
    %359 = vmatpush2.msra.mxu0 0.0
    %360 = vmatprep.subr.mxu0 0.0
    %361 = vmatpush2.msra.mxu0 0.0
    %362 = vmatprep.subr.mxu0 0.0
    %363 = vmatpush2.msra.mxu0 0.0
    %364 = vmatprep.subr.mxu0 0.0
    %365 = vmatpush2.msra.mxu0 0.0
    %366 = vmatprep.subr.mxu0 0.0
    %367 = vmatpush2.msra.mxu0 0.0
    %368 = vmatprep.subr.mxu0 0.0
    %369 = vmatpush2.msra.mxu0 0.0
    %370 = vmatprep.subr.mxu0 0.0
    %371 = vmatpush2.msra.mxu0 0.0
    %372 = vmatprep.mubr.f32.mxu0 0.0
    %v373 = vand.u32 %v173, 4294901760
    %374 = vmatmul.mubr.f32.gmra.mxu0 %v373
    %v375 = vpop.f32.mrf.mxu0
    %v376 = vadd.f32 %v263, %v375
    %v377 = vpop.f32.mrf.mxu0
    %v378 = vadd.f32 %v265, %v377
    %379 = vmatprep.mubr.f32.mxu0 0.0
    %v380 = vand.u32 %v176, 4294901760
    %381 = vmatmul.mubr.f32.gmra.mxu0 %v380
    %v382 = vpop.f32.mrf.mxu0
    %v383 = vadd.f32 %v274, %v382
    %v384 = vpop.f32.mrf.mxu0
    %v385 = vadd.f32 %v276, %v384
    %386 = vdwg.mxu0
    %387 = vmatprep.subr.mxu0 0.0
    %388 = vmatpush1.msra.mxu0 0.0
    %389 = vmatprep.subr.mxu0 0.0
    %390 = vmatpush1.msra.mxu0 0.0
    %391 = vmatprep.subr.mxu0 0.0
    %392 = vmatpush1.msra.mxu0 0.0
    %393 = vmatprep.subr.mxu0 0.0
    %394 = vmatpush1.msra.mxu0 0.0
    %395 = vmatprep.subr.mxu0 0.0
    %396 = vmatpush1.msra.mxu0 0.0
    %397 = vmatprep.subr.mxu0 0.0
    %398 = vmatpush1.msra.mxu0 0.0
    %399 = vmatprep.subr.mxu0 0.0
    %400 = vmatpush1.msra.mxu0 0.0
    %401 = vmatprep.subr.mxu0 0.0
    %402 = vmatpush1.msra.mxu0 0.0
    %403 = vmatprep.subr.mxu0 0.0
    %404 = vmatpush1.msra.mxu0 0.0
    %405 = vmatprep.subr.mxu0 0.0
    %406 = vmatpush1.msra.mxu0 0.0
    %407 = vmatprep.subr.mxu0 0.0
    %408 = vmatpush1.msra.mxu0 0.0
    %409 = vmatprep.subr.mxu0 0.0
    %410 = vmatpush1.msra.mxu0 0.0
    %411 = vmatprep.subr.mxu0 0.0
    %412 = vmatpush1.msra.mxu0 0.0
    %v413 = vand.u32 %v183, 4294901760
    %v414 = vsub.f32 %v183, %v413
    %415 = vmatprep.subr.mxu0 %v414
    %v416 = vand.u32 %v180, 4294901760
    %v417 = vsub.f32 %v180, %v416
    %418 = vmatpush1.msra.mxu0 %v417
    %v419 = vand.u32 %v156, 4294901760
    %v420 = vsub.f32 %v156, %v419
    %421 = vmatprep.subr.mxu0 %v420
    %v422 = vand.u32 %v155, 4294901760
    %v423 = vsub.f32 %v155, %v422
    %424 = vmatpush1.msra.mxu0 %v423
    %v425 = vand.u32 %v154, 4294901760
    %v426 = vsub.f32 %v154, %v425
    %427 = vmatprep.subr.mxu0 %v426
    %v428 = vand.u32 %v153, 4294901760
    %v429 = vsub.f32 %v153, %v428
    %430 = vmatpush1.msra.mxu0 %v429
    %431 = vmatprep.subr.mxu0 0.0
    %432 = vmatpush2.msra.mxu0 0.0
    %433 = vmatprep.subr.mxu0 0.0
    %434 = vmatpush2.msra.mxu0 0.0
    %435 = vmatprep.subr.mxu0 0.0
    %436 = vmatpush2.msra.mxu0 0.0
    %437 = vmatprep.subr.mxu0 0.0
    %438 = vmatpush2.msra.mxu0 0.0
    %439 = vmatprep.subr.mxu0 0.0
    %440 = vmatpush2.msra.mxu0 0.0
    %441 = vmatprep.subr.mxu0 0.0
    %442 = vmatpush2.msra.mxu0 0.0
    %443 = vmatprep.subr.mxu0 0.0
    %444 = vmatpush2.msra.mxu0 0.0
    %445 = vmatprep.subr.mxu0 0.0
    %446 = vmatpush2.msra.mxu0 0.0
    %447 = vmatprep.subr.mxu0 0.0
    %448 = vmatpush2.msra.mxu0 0.0
    %449 = vmatprep.subr.mxu0 0.0
    %450 = vmatpush2.msra.mxu0 0.0
    %451 = vmatprep.subr.mxu0 0.0
    %452 = vmatpush2.msra.mxu0 0.0
    %453 = vmatprep.subr.mxu0 0.0
    %454 = vmatpush2.msra.mxu0 0.0
    %455 = vmatprep.subr.mxu0 0.0
    %456 = vmatpush2.msra.mxu0 0.0
    %457 = vmatprep.subr.mxu0 0.0
    %458 = vmatpush2.msra.mxu0 0.0
    %459 = vmatprep.subr.mxu0 0.0
    %460 = vmatpush2.msra.mxu0 0.0
    %461 = vmatprep.subr.mxu0 0.0
    %462 = vmatpush2.msra.mxu0 0.0
    %463 = vmatprep.mubr.f32.mxu0 0.0
    %v464 = vand.u32 %v173, 4294901760
    %v465 = vsub.f32 %v173, %v464
    %466 = vmatmul.mubr.f32.gmra.mxu0 %v465
    %v467 = vpop.f32.mrf.mxu0
    %v468 = vadd.f32 %v376, %v467
    %v469 = vpop.f32.mrf.mxu0
    %v470 = vadd.f32 %v378, %v469
    %471 = vmatprep.mubr.f32.mxu0 0.0
    %v472 = vand.u32 %v176, 4294901760
    %v473 = vsub.f32 %v176, %v472
    %474 = vmatmul.mubr.f32.gmra.mxu0 %v473
    %v475 = vpop.f32.mrf.mxu0
    %v476 = vadd.f32 %v383, %v475
    %v477 = vpop.f32.mrf.mxu0
    %v478 = vadd.f32 %v385, %v477
    %479 = vdwg.mxu0
    %480 = vmatprep.subr.mxu0 0.0
    %481 = vmatpush1.msra.mxu0 0.0
    %482 = vmatprep.subr.mxu0 0.0
    %483 = vmatpush1.msra.mxu0 0.0
    %484 = vmatprep.subr.mxu0 0.0
    %485 = vmatpush1.msra.mxu0 0.0
    %486 = vmatprep.subr.mxu0 0.0
    %487 = vmatpush1.msra.mxu0 0.0
    %488 = vmatprep.subr.mxu0 0.0
    %489 = vmatpush1.msra.mxu0 0.0
    %490 = vmatprep.subr.mxu0 0.0
    %491 = vmatpush1.msra.mxu0 0.0
    %492 = vmatprep.subr.mxu0 0.0
    %493 = vmatpush1.msra.mxu0 0.0
    %494 = vmatprep.subr.mxu0 0.0
    %495 = vmatpush1.msra.mxu0 0.0
    %496 = vmatprep.subr.mxu0 0.0
    %497 = vmatpush1.msra.mxu0 0.0
    %498 = vmatprep.subr.mxu0 0.0
    %499 = vmatpush1.msra.mxu0 0.0
    %500 = vmatprep.subr.mxu0 0.0
    %501 = vmatpush1.msra.mxu0 0.0
    %502 = vmatprep.subr.mxu0 0.0
    %503 = vmatpush1.msra.mxu0 0.0
    %504 = vmatprep.subr.mxu0 0.0
    %505 = vmatpush1.msra.mxu0 0.0
    %v506 = vand.u32 %v183, 4294901760
    %507 = vmatprep.subr.mxu0 %v506
    %v508 = vand.u32 %v180, 4294901760
    %509 = vmatpush1.msra.mxu0 %v508
    %v510 = vand.u32 %v156, 4294901760
    %511 = vmatprep.subr.mxu0 %v510
    %v512 = vand.u32 %v155, 4294901760
    %513 = vmatpush1.msra.mxu0 %v512
    %v514 = vand.u32 %v154, 4294901760
    %515 = vmatprep.subr.mxu0 %v514
    %v516 = vand.u32 %v153, 4294901760
    %517 = vmatpush1.msra.mxu0 %v516
    %518 = vmatprep.subr.mxu0 0.0
    %519 = vmatpush2.msra.mxu0 0.0
    %520 = vmatprep.subr.mxu0 0.0
    %521 = vmatpush2.msra.mxu0 0.0
    %522 = vmatprep.subr.mxu0 0.0
    %523 = vmatpush2.msra.mxu0 0.0
    %524 = vmatprep.subr.mxu0 0.0
    %525 = vmatpush2.msra.mxu0 0.0
    %526 = vmatprep.subr.mxu0 0.0
    %527 = vmatpush2.msra.mxu0 0.0
    %528 = vmatprep.subr.mxu0 0.0
    %529 = vmatpush2.msra.mxu0 0.0
    %530 = vmatprep.subr.mxu0 0.0
    %531 = vmatpush2.msra.mxu0 0.0
    %532 = vmatprep.subr.mxu0 0.0
    %533 = vmatpush2.msra.mxu0 0.0
    %534 = vmatprep.subr.mxu0 0.0
    %535 = vmatpush2.msra.mxu0 0.0
    %536 = vmatprep.subr.mxu0 0.0
    %537 = vmatpush2.msra.mxu0 0.0
    %538 = vmatprep.subr.mxu0 0.0
    %539 = vmatpush2.msra.mxu0 0.0
    %540 = vmatprep.subr.mxu0 0.0
    %541 = vmatpush2.msra.mxu0 0.0
    %542 = vmatprep.subr.mxu0 0.0
    %543 = vmatpush2.msra.mxu0 0.0
    %544 = vmatprep.subr.mxu0 0.0
    %545 = vmatpush2.msra.mxu0 0.0
    %546 = vmatprep.subr.mxu0 0.0
    %547 = vmatpush2.msra.mxu0 0.0
    %548 = vmatprep.subr.mxu0 0.0
    %549 = vmatpush2.msra.mxu0 0.0
    %550 = vmatprep.mubr.f32.mxu0 0.0
    %v551 = vand.u32 %v173, 4294901760
    %v552 = vsub.f32 %v173, %v551
    %v553 = vand.u32 %v552, 4294901760
    %554 = vmatmul.mubr.f32.gmra.mxu0 %v553
    %v555 = vpop.f32.mrf.mxu0
    %v556 = vadd.f32 %v468, %v555
    %v557 = vpop.f32.mrf.mxu0
    %v558 = vadd.f32 %v470, %v557
    %559 = vmatprep.mubr.f32.mxu0 0.0
    %v560 = vand.u32 %v176, 4294901760
    %v561 = vsub.f32 %v176, %v560
    %v562 = vand.u32 %v561, 4294901760
    %563 = vmatmul.mubr.f32.gmra.mxu0 %v562
    %v564 = vpop.f32.mrf.mxu0
    %v565 = vadd.f32 %v476, %v564
    %v566 = vpop.f32.mrf.mxu0
    %v567 = vadd.f32 %v478, %v566
    %568 = vdwg.mxu0
    %569 = vmatprep.subr.mxu0 0.0
    %570 = vmatpush1.msra.mxu0 0.0
    %571 = vmatprep.subr.mxu0 0.0
    %572 = vmatpush1.msra.mxu0 0.0
    %573 = vmatprep.subr.mxu0 0.0
    %574 = vmatpush1.msra.mxu0 0.0
    %575 = vmatprep.subr.mxu0 0.0
    %576 = vmatpush1.msra.mxu0 0.0
    %577 = vmatprep.subr.mxu0 0.0
    %578 = vmatpush1.msra.mxu0 0.0
    %579 = vmatprep.subr.mxu0 0.0
    %580 = vmatpush1.msra.mxu0 0.0
    %581 = vmatprep.subr.mxu0 0.0
    %582 = vmatpush1.msra.mxu0 0.0
    %583 = vmatprep.subr.mxu0 0.0
    %584 = vmatpush1.msra.mxu0 0.0
    %585 = vmatprep.subr.mxu0 0.0
    %586 = vmatpush1.msra.mxu0 0.0
    %587 = vmatprep.subr.mxu0 0.0
    %588 = vmatpush1.msra.mxu0 0.0
    %589 = vmatprep.subr.mxu0 0.0
    %590 = vmatpush1.msra.mxu0 0.0
    %591 = vmatprep.subr.mxu0 0.0
    %592 = vmatpush1.msra.mxu0 0.0
    %593 = vmatprep.subr.mxu0 0.0
    %594 = vmatpush1.msra.mxu0 0.0
    %v595 = vand.u32 %v183, 4294901760
    %v596 = vsub.f32 %v183, %v595
    %v597 = vand.u32 %v596, 4294901760
    %598 = vmatprep.subr.mxu0 %v597
    %v599 = vand.u32 %v180, 4294901760
    %v600 = vsub.f32 %v180, %v599
    %v601 = vand.u32 %v600, 4294901760
    %602 = vmatpush1.msra.mxu0 %v601
    %v603 = vand.u32 %v156, 4294901760
    %v604 = vsub.f32 %v156, %v603
    %v605 = vand.u32 %v604, 4294901760
    %606 = vmatprep.subr.mxu0 %v605
    %v607 = vand.u32 %v155, 4294901760
    %v608 = vsub.f32 %v155, %v607
    %v609 = vand.u32 %v608, 4294901760
    %610 = vmatpush1.msra.mxu0 %v609
    %v611 = vand.u32 %v154, 4294901760
    %v612 = vsub.f32 %v154, %v611
    %v613 = vand.u32 %v612, 4294901760
    %614 = vmatprep.subr.mxu0 %v613
    %v615 = vand.u32 %v153, 4294901760
    %v616 = vsub.f32 %v153, %v615
    %v617 = vand.u32 %v616, 4294901760
    %618 = vmatpush1.msra.mxu0 %v617
    %619 = vmatprep.subr.mxu0 0.0
    %620 = vmatpush2.msra.mxu0 0.0
    %621 = vmatprep.subr.mxu0 0.0
    %622 = vmatpush2.msra.mxu0 0.0
    %623 = vmatprep.subr.mxu0 0.0
    %624 = vmatpush2.msra.mxu0 0.0
    %625 = vmatprep.subr.mxu0 0.0
    %626 = vmatpush2.msra.mxu0 0.0
    %627 = vmatprep.subr.mxu0 0.0
    %628 = vmatpush2.msra.mxu0 0.0
    %629 = vmatprep.subr.mxu0 0.0
    %630 = vmatpush2.msra.mxu0 0.0
    %631 = vmatprep.subr.mxu0 0.0
    %632 = vmatpush2.msra.mxu0 0.0
    %633 = vmatprep.subr.mxu0 0.0
    %634 = vmatpush2.msra.mxu0 0.0
    %635 = vmatprep.subr.mxu0 0.0
    %636 = vmatpush2.msra.mxu0 0.0
    %637 = vmatprep.subr.mxu0 0.0
    %638 = vmatpush2.msra.mxu0 0.0
    %639 = vmatprep.subr.mxu0 0.0
    %640 = vmatpush2.msra.mxu0 0.0
    %641 = vmatprep.subr.mxu0 0.0
    %642 = vmatpush2.msra.mxu0 0.0
    %643 = vmatprep.subr.mxu0 0.0
    %644 = vmatpush2.msra.mxu0 0.0
    %645 = vmatprep.subr.mxu0 0.0
    %646 = vmatpush2.msra.mxu0 0.0
    %647 = vmatprep.subr.mxu0 0.0
    %648 = vmatpush2.msra.mxu0 0.0
    %649 = vmatprep.subr.mxu0 0.0
    %650 = vmatpush2.msra.mxu0 0.0
    %651 = vmatprep.mubr.f32.mxu0 0.0
    %v652 = vand.u32 %v173, 4294901760
    %653 = vmatmul.mubr.f32.gmra.mxu0 %v652
    %v654 = vpop.f32.mrf.mxu0
    %v655 = vadd.f32 %v556, %v654
    %v656 = vpop.f32.mrf.mxu0
    %v657 = vadd.f32 %v558, %v656
    %658 = vmatprep.mubr.f32.mxu0 0.0
    %v659 = vand.u32 %v176, 4294901760
    %660 = vmatmul.mubr.f32.gmra.mxu0 %v659
    %v661 = vpop.f32.mrf.mxu0
    %v662 = vadd.f32 %v565, %v661
    %v663 = vpop.f32.mrf.mxu0
    %v664 = vadd.f32 %v567, %v663
    %665 = vdwg.mxu0
    %666 = vmatprep.subr.mxu0 0.0
    %667 = vmatpush1.msra.mxu0 0.0
    %668 = vmatprep.subr.mxu0 0.0
    %669 = vmatpush1.msra.mxu0 0.0
    %670 = vmatprep.subr.mxu0 0.0
    %671 = vmatpush1.msra.mxu0 0.0
    %672 = vmatprep.subr.mxu0 0.0
    %673 = vmatpush1.msra.mxu0 0.0
    %674 = vmatprep.subr.mxu0 0.0
    %675 = vmatpush1.msra.mxu0 0.0
    %676 = vmatprep.subr.mxu0 0.0
    %677 = vmatpush1.msra.mxu0 0.0
    %678 = vmatprep.subr.mxu0 0.0
    %679 = vmatpush1.msra.mxu0 0.0
    %680 = vmatprep.subr.mxu0 0.0
    %681 = vmatpush1.msra.mxu0 0.0
    %682 = vmatprep.subr.mxu0 0.0
    %683 = vmatpush1.msra.mxu0 0.0
    %684 = vmatprep.subr.mxu0 0.0
    %685 = vmatpush1.msra.mxu0 0.0
    %686 = vmatprep.subr.mxu0 0.0
    %687 = vmatpush1.msra.mxu0 0.0
    %688 = vmatprep.subr.mxu0 0.0
    %689 = vmatpush1.msra.mxu0 0.0
    %690 = vmatprep.subr.mxu0 0.0
    %691 = vmatpush1.msra.mxu0 0.0
    %v692 = vand.u32 %v183, 4294901760
    %693 = vmatprep.subr.mxu0 %v692
    %v694 = vand.u32 %v180, 4294901760
    %695 = vmatpush1.msra.mxu0 %v694
    %v696 = vand.u32 %v156, 4294901760
    %697 = vmatprep.subr.mxu0 %v696
    %v698 = vand.u32 %v155, 4294901760
    %699 = vmatpush1.msra.mxu0 %v698
    %v700 = vand.u32 %v154, 4294901760
    %701 = vmatprep.subr.mxu0 %v700
    %v702 = vand.u32 %v153, 4294901760
    %703 = vmatpush1.msra.mxu0 %v702
    %704 = vmatprep.subr.mxu0 0.0
    %705 = vmatpush2.msra.mxu0 0.0
    %706 = vmatprep.subr.mxu0 0.0
    %707 = vmatpush2.msra.mxu0 0.0
    %708 = vmatprep.subr.mxu0 0.0
    %709 = vmatpush2.msra.mxu0 0.0
    %710 = vmatprep.subr.mxu0 0.0
    %711 = vmatpush2.msra.mxu0 0.0
    %712 = vmatprep.subr.mxu0 0.0
    %713 = vmatpush2.msra.mxu0 0.0
    %714 = vmatprep.subr.mxu0 0.0
    %715 = vmatpush2.msra.mxu0 0.0
    %716 = vmatprep.subr.mxu0 0.0
    %717 = vmatpush2.msra.mxu0 0.0
    %718 = vmatprep.subr.mxu0 0.0
    %719 = vmatpush2.msra.mxu0 0.0
    %720 = vmatprep.subr.mxu0 0.0
    %721 = vmatpush2.msra.mxu0 0.0
    %722 = vmatprep.subr.mxu0 0.0
    %723 = vmatpush2.msra.mxu0 0.0
    %724 = vmatprep.subr.mxu0 0.0
    %725 = vmatpush2.msra.mxu0 0.0
    %726 = vmatprep.subr.mxu0 0.0
    %727 = vmatpush2.msra.mxu0 0.0
    %728 = vmatprep.subr.mxu0 0.0
    %729 = vmatpush2.msra.mxu0 0.0
    %730 = vmatprep.subr.mxu0 0.0
    %731 = vmatpush2.msra.mxu0 0.0
    %732 = vmatprep.subr.mxu0 0.0
    %733 = vmatpush2.msra.mxu0 0.0
    %734 = vmatprep.subr.mxu0 0.0
    %735 = vmatpush2.msra.mxu0 0.0
    %736 = vmatprep.mubr.f32.mxu0 0.0
    %v737 = vand.u32 %v173, 4294901760
    %738 = vmatmul.mubr.f32.gmra.mxu0 %v737
    %v739 = vpop.f32.mrf.mxu0
    %v740 = vadd.f32 %v655, %v739
    %v741 = vpop.f32.mrf.mxu0
    %v742 = vadd.f32 %v657, %v741
    %743 = vmatprep.mubr.f32.mxu0 0.0
    %v744 = vand.u32 %v176, 4294901760
    %745 = vmatmul.mubr.f32.gmra.mxu0 %v744
    %v746 = vpop.f32.mrf.mxu0
    %v747 = vadd.f32 %v662, %v746
    %v748 = vpop.f32.mrf.mxu0
    %v749 = vadd.f32 %v664, %v748
    %750 = vdwg.mxu0
    %v751 = vmax.f32 %v740, 0.0
    %v752 = vmax.f32 %v742, 0.0
    %v753 = vmax.f32 %v747, 0.0
    %v754 = vmax.f32 %v749, 0.0
    %v755 = vld [vmem:[#allocation7] sm:$0xff]
    %v756 = vld [vmem:[#allocation7 + $0x8] sm:$0xff]
    %v757 = vld [vmem:[#allocation7 + $0x10] sm:$0xff]
    %v758 = vld [vmem:[#allocation7 + $0x18] sm:$0xff]
    %v759 = vld [vmem:[#allocation7 + $0x20] sm:$0xff]
    %v760 = vld [vmem:[#allocation7 + $0x28] sm:$0xff]
    %v761 = vld [vmem:[#allocation7 + $0x30] sm:$0xff]
    %v762 = vld [vmem:[#allocation7 + $0x38] sm:$0xff]
    %v763 = vld [vmem:[#allocation7 + $0x40] sm:$0xff]
    %v764 = vld [vmem:[#allocation7 + $0x48] sm:$0xff]
    %v765 = vld [vmem:[#allocation7 + $0x50] sm:$0xff]
    %v766 = vld [vmem:[#allocation7 + $0x58] sm:$0xff]
    %v767 = vld [vmem:[#allocation7 + $0x60] sm:$0xff]
    %v768 = vld [vmem:[#allocation7 + $0x68] sm:$0xff]
    %v769 = vld [vmem:[#allocation7 + $0x70] sm:$0xff]
    %v770 = vld [vmem:[#allocation7 + $0x78] sm:$0xff]
    %v771 = vld [vmem:[#allocation7 + $0x80] sm:$0xff]
    %v772 = vld [vmem:[#allocation7 + $0x88] sm:$0xff]
    %v773 = vld [vmem:[#allocation7 + $0x90] sm:$0xff]
    %v774 = vld [vmem:[#allocation7 + $0x98] sm:$0xff]
    %v775 = vld [vmem:[#allocation7 + $0xa0] sm:$0xff]
    %v776 = vld [vmem:[#allocation7 + $0xa8] sm:$0xff]
    %v777 = vld [vmem:[#allocation7 + $0xb0] sm:$0xff]
    %v778 = vld [vmem:[#allocation7 + $0xb8] sm:$0xff]
    %v779 = vld [vmem:[#allocation7 + $0xc0] sm:$0xff]
    %v780 = vld [vmem:[#allocation7 + $0xc8] sm:$0xff]
    %v781 = vld [vmem:[#allocation7 + $0xd0] sm:$0xff]
    %v782 = vld [vmem:[#allocation7 + $0xd8] sm:$0xff]
    %v783 = vld [vmem:[#allocation7 + $0xe0] sm:$0xff]
    %v784 = vld [vmem:[#allocation7 + $0xe8] sm:$0xff]
    %v785 = vld [vmem:[#allocation7 + $0xf0] sm:$0xff]
    %v786 = vld [vmem:[#allocation7 + $0xf8] sm:$0xff]
    %v787 = vld [vmem:[#allocation8] sm:$0xff]
    %v788 = vld [vmem:[#allocation8 + $0x8] sm:$0xff]
    %v789 = vld [vmem:[#allocation8 + $0x10] sm:$0xff]
    %v790 = vld [vmem:[#allocation8 + $0x18] sm:$0xff]
    %v791 = vld [vmem:[#allocation8 + $0x20] sm:$0xff]
    %v792 = vld [vmem:[#allocation8 + $0x28] sm:$0xff]
    %v793 = vld [vmem:[#allocation8 + $0x30] sm:$0xff]
    %v794 = vld [vmem:[#allocation8 + $0x38] sm:$0xff]
    %v795 = vld [vmem:[#allocation8 + $0x40] sm:$0xff]
    %v796 = vld [vmem:[#allocation8 + $0x48] sm:$0xff]
    %v797 = vld [vmem:[#allocation8 + $0x50] sm:$0xff]
    %v798 = vld [vmem:[#allocation8 + $0x58] sm:$0xff]
    %v799 = vld [vmem:[#allocation8 + $0x60] sm:$0xff]
    %v800 = vld [vmem:[#allocation8 + $0x68] sm:$0xff]
    %v801 = vld [vmem:[#allocation8 + $0x70] sm:$0xff]
    %v802 = vld [vmem:[#allocation8 + $0x78] sm:$0xff]
    %v803 = vld [vmem:[#allocation8 + $0x80] sm:$0xff]
    %v804 = vld [vmem:[#allocation8 + $0x88] sm:$0xff]
    %v805 = vld [vmem:[#allocation8 + $0x90] sm:$0xff]
    %v806 = vld [vmem:[#allocation8 + $0x98] sm:$0xff]
    %v807 = vld [vmem:[#allocation8 + $0xa0] sm:$0xff]
    %v808 = vld [vmem:[#allocation8 + $0xa8] sm:$0xff]
    %v809 = vld [vmem:[#allocation8 + $0xb0] sm:$0xff]
    %v810 = vld [vmem:[#allocation8 + $0xb8] sm:$0xff]
    %v811 = vld [vmem:[#allocation8 + $0xc0] sm:$0xff]
    %v812 = vld [vmem:[#allocation8 + $0xc8] sm:$0xff]
    %v813 = vld [vmem:[#allocation8 + $0xd0] sm:$0xff]
    %v814 = vld [vmem:[#allocation8 + $0xd8] sm:$0xff]
    %v815 = vld [vmem:[#allocation8 + $0xe0] sm:$0xff]
    %v816 = vld [vmem:[#allocation8 + $0xe8] sm:$0xff]
    %v817 = vld [vmem:[#allocation8 + $0xf0] sm:$0xff]
    %v818 = vld [vmem:[#allocation8 + $0xf8] sm:$0xff]
    %v819 = vpack.c.bf16 %v753, %v751
    %v820 = vpack.c.bf16 %v754, %v752
    %v821 = vunpack.c.l.bf16 %v819
    %v822 = vunpack.c.l.bf16 %v820
    %v823 = vunpack.c.h.bf16 %v819
    %v824 = vunpack.c.h.bf16 %v820
    %v825 = vsub.f32 %v751, %v821
    %v826 = vsub.f32 %v752, %v822
    %v827 = vsub.f32 %v753, %v823
    %v828 = vsub.f32 %v754, %v824
    %v829 = vpack.c.bf16 %v827, %v825
    %v830 = vpack.c.bf16 %v828, %v826
    %v863 = vunpack.c.l.b16 %v755
    %v864 = vunpack.c.h.b16 %v755
    %v865 = vunpack.c.l.b16 %v756
    %v866 = vunpack.c.h.b16 %v756
    %v867 = vunpack.c.l.b16 %v757
    %v868 = vunpack.c.h.b16 %v757
    %v869 = vunpack.c.l.b16 %v758
    %v870 = vunpack.c.h.b16 %v758
    %v871 = vunpack.c.l.b16 %v759
    %v872 = vunpack.c.h.b16 %v759
    %v873 = vunpack.c.l.b16 %v760
    %v874 = vunpack.c.h.b16 %v760
    %v875 = vunpack.c.l.b16 %v761
    %v876 = vunpack.c.h.b16 %v761
    %v877 = vunpack.c.l.b16 %v762
    %v878 = vunpack.c.h.b16 %v762
    %v879 = vunpack.c.l.b16 %v763
    %v880 = vunpack.c.h.b16 %v763
    %v881 = vunpack.c.l.b16 %v764
    %v882 = vunpack.c.h.b16 %v764
    %v883 = vunpack.c.l.b16 %v765
    %v884 = vunpack.c.h.b16 %v765
    %v885 = vunpack.c.l.b16 %v766
    %v886 = vunpack.c.h.b16 %v766
    %v887 = vunpack.c.l.b16 %v767
    %v888 = vunpack.c.h.b16 %v767
    %v889 = vunpack.c.l.b16 %v768
    %v890 = vunpack.c.h.b16 %v768
    %v891 = vunpack.c.l.b16 %v769
    %v892 = vunpack.c.h.b16 %v769
    %v893 = vunpack.c.l.b16 %v770
    %v894 = vunpack.c.h.b16 %v770
    %v895 = vunpack.c.l.b16 %v771
    %v896 = vunpack.c.h.b16 %v771
    %v897 = vunpack.c.l.b16 %v772
    %v898 = vunpack.c.h.b16 %v772
    %v899 = vunpack.c.l.b16 %v773
    %v900 = vunpack.c.h.b16 %v773
    %v901 = vunpack.c.l.b16 %v774
    %v902 = vunpack.c.h.b16 %v774
    %v903 = vunpack.c.l.b16 %v775
    %v904 = vunpack.c.h.b16 %v775
    %v905 = vunpack.c.l.b16 %v776
    %v906 = vunpack.c.h.b16 %v776
    %v907 = vunpack.c.l.b16 %v777
    %v908 = vunpack.c.h.b16 %v777
    %v909 = vunpack.c.l.b16 %v778
    %v910 = vunpack.c.h.b16 %v778
    %v911 = vunpack.c.l.b16 %v779
    %v912 = vunpack.c.h.b16 %v779
    %v913 = vunpack.c.l.b16 %v780
    %v914 = vunpack.c.h.b16 %v780
    %v915 = vunpack.c.l.b16 %v781
    %v916 = vunpack.c.h.b16 %v781
    %v917 = vunpack.c.l.b16 %v782
    %v918 = vunpack.c.h.b16 %v782
    %v919 = vunpack.c.l.b16 %v783
    %v920 = vunpack.c.h.b16 %v783
    %v921 = vunpack.c.l.b16 %v784
    %v922 = vunpack.c.h.b16 %v784
    %v923 = vunpack.c.l.b16 %v785
    %v924 = vunpack.c.h.b16 %v785
    %v925 = vunpack.c.l.b16 %v786
    %v926 = vunpack.c.h.b16 %v786
    %v927 = vpack.c.b16 %v865, %v863
    %v928 = vpack.c.b16 %v866, %v864
    %v929 = vpack.c.b16 %v869, %v867
    %v930 = vpack.c.b16 %v870, %v868
    %v931 = vpack.c.b16 %v873, %v871
    %v932 = vpack.c.b16 %v874, %v872
    %v933 = vpack.c.b16 %v877, %v875
    %v934 = vpack.c.b16 %v878, %v876
    %v935 = vpack.c.b16 %v881, %v879
    %v936 = vpack.c.b16 %v882, %v880
    %v937 = vpack.c.b16 %v885, %v883
    %v938 = vpack.c.b16 %v886, %v884
    %v939 = vpack.c.b16 %v889, %v887
    %v940 = vpack.c.b16 %v890, %v888
    %v941 = vpack.c.b16 %v893, %v891
    %v942 = vpack.c.b16 %v894, %v892
    %v943 = vpack.c.b16 %v897, %v895
    %v944 = vpack.c.b16 %v898, %v896
    %v945 = vpack.c.b16 %v901, %v899
    %v946 = vpack.c.b16 %v902, %v900
    %v947 = vpack.c.b16 %v905, %v903
    %v948 = vpack.c.b16 %v906, %v904
    %v949 = vpack.c.b16 %v909, %v907
    %v950 = vpack.c.b16 %v910, %v908
    %v951 = vpack.c.b16 %v913, %v911
    %v952 = vpack.c.b16 %v914, %v912
    %v953 = vpack.c.b16 %v917, %v915
    %v954 = vpack.c.b16 %v918, %v916
    %v955 = vpack.c.b16 %v921, %v919
    %v956 = vpack.c.b16 %v922, %v920
    %v957 = vpack.c.b16 %v925, %v923
    %v958 = vpack.c.b16 %v926, %v924
    %991 = vmatprep.subr.bf16.mxu0 %v942
    %992 = vmatpush1.bf16.msra.mxu0 %v941
    %993 = vmatprep.subr.bf16.mxu0 %v940
    %994 = vmatpush1.bf16.msra.mxu0 %v939
    %995 = vmatprep.subr.bf16.mxu0 %v938
    %996 = vmatpush1.bf16.msra.mxu0 %v937
    %997 = vmatprep.subr.bf16.mxu0 %v936
    %998 = vmatpush1.bf16.msra.mxu0 %v935
    %999 = vmatprep.subr.bf16.mxu0 %v934
    %1000 = vmatpush1.bf16.msra.mxu0 %v933
    %1001 = vmatprep.subr.bf16.mxu0 %v932
    %1002 = vmatpush1.bf16.msra.mxu0 %v931
    %1003 = vmatprep.subr.bf16.mxu0 %v930
    %1004 = vmatpush1.bf16.msra.mxu0 %v929
    %1005 = vmatprep.subr.bf16.mxu0 %v928
    %1006 = vmatpush1.bf16.msra.mxu0 %v927
    %1007 = vmatprep.subr.bf16.mxu0 %v958
    %1008 = vmatpush2.bf16.msra.mxu0 %v957
    %1009 = vmatprep.subr.bf16.mxu0 %v956
    %1010 = vmatpush2.bf16.msra.mxu0 %v955
    %1011 = vmatprep.subr.bf16.mxu0 %v954
    %1012 = vmatpush2.bf16.msra.mxu0 %v953
    %1013 = vmatprep.subr.bf16.mxu0 %v952
    %1014 = vmatpush2.bf16.msra.mxu0 %v951
    %1015 = vmatprep.subr.bf16.mxu0 %v950
    %1016 = vmatpush2.bf16.msra.mxu0 %v949
    %1017 = vmatprep.subr.bf16.mxu0 %v948
    %1018 = vmatpush2.bf16.msra.mxu0 %v947
    %1019 = vmatprep.subr.bf16.mxu0 %v946
    %1020 = vmatpush2.bf16.msra.mxu0 %v945
    %1021 = vmatprep.subr.bf16.mxu0 %v944
    %1022 = vmatpush2.bf16.msra.mxu0 %v943
    %1023 = vmatprep.mubr.bf16.mxu0 %v830
    %1024 = vmatmul.mubr.bf16.gmra.mxu0 %v829
    %v1025 = vpop.f32.mrf.mxu0
    %v1026 = vadd.f32 0.0, %v1025
    %v1027 = vpop.f32.mrf.mxu0
    %v1028 = vadd.f32 0.0, %v1027
    %v1029 = vpop.f32.mrf.mxu0
    %v1030 = vadd.f32 0.0, %v1029
    %v1031 = vpop.f32.mrf.mxu0
    %v1032 = vadd.f32 0.0, %v1031
    %1033 = vdwg.mxu0
    %1034 = vmatprep.subr.bf16.mxu0 %v942
    %1035 = vmatpush1.bf16.msra.mxu0 %v941
    %1036 = vmatprep.subr.bf16.mxu0 %v940
    %1037 = vmatpush1.bf16.msra.mxu0 %v939
    %1038 = vmatprep.subr.bf16.mxu0 %v938
    %1039 = vmatpush1.bf16.msra.mxu0 %v937
    %1040 = vmatprep.subr.bf16.mxu0 %v936
    %1041 = vmatpush1.bf16.msra.mxu0 %v935
    %1042 = vmatprep.subr.bf16.mxu0 %v934
    %1043 = vmatpush1.bf16.msra.mxu0 %v933
    %1044 = vmatprep.subr.bf16.mxu0 %v932
    %1045 = vmatpush1.bf16.msra.mxu0 %v931
    %1046 = vmatprep.subr.bf16.mxu0 %v930
    %1047 = vmatpush1.bf16.msra.mxu0 %v929
    %1048 = vmatprep.subr.bf16.mxu0 %v928
    %1049 = vmatpush1.bf16.msra.mxu0 %v927
    %1050 = vmatprep.subr.bf16.mxu0 %v958
    %1051 = vmatpush2.bf16.msra.mxu0 %v957
    %1052 = vmatprep.subr.bf16.mxu0 %v956
    %1053 = vmatpush2.bf16.msra.mxu0 %v955
    %1054 = vmatprep.subr.bf16.mxu0 %v954
    %1055 = vmatpush2.bf16.msra.mxu0 %v953
    %1056 = vmatprep.subr.bf16.mxu0 %v952
    %1057 = vmatpush2.bf16.msra.mxu0 %v951
    %1058 = vmatprep.subr.bf16.mxu0 %v950
    %1059 = vmatpush2.bf16.msra.mxu0 %v949
    %1060 = vmatprep.subr.bf16.mxu0 %v948
    %1061 = vmatpush2.bf16.msra.mxu0 %v947
    %1062 = vmatprep.subr.bf16.mxu0 %v946
    %1063 = vmatpush2.bf16.msra.mxu0 %v945
    %1064 = vmatprep.subr.bf16.mxu0 %v944
    %1065 = vmatpush2.bf16.msra.mxu0 %v943
    %1066 = vmatprep.mubr.bf16.mxu0 %v820
    %1067 = vmatmul.mubr.bf16.gmra.mxu0 %v819
    %v1068 = vpop.f32.mrf.mxu0
    %v1069 = vadd.f32 %v1026, %v1068
    %v1070 = vpop.f32.mrf.mxu0
    %v1071 = vadd.f32 %v1028, %v1070
    %v1072 = vpop.f32.mrf.mxu0
    %v1073 = vadd.f32 %v1030, %v1072
    %v1074 = vpop.f32.mrf.mxu0
    %v1075 = vadd.f32 %v1032, %v1074
    %1076 = vdwg.mxu0
    %v1109 = vunpack.c.l.b16 %v787
    %v1110 = vunpack.c.h.b16 %v787
    %v1111 = vunpack.c.l.b16 %v788
    %v1112 = vunpack.c.h.b16 %v788
    %v1113 = vunpack.c.l.b16 %v789
    %v1114 = vunpack.c.h.b16 %v789
    %v1115 = vunpack.c.l.b16 %v790
    %v1116 = vunpack.c.h.b16 %v790
    %v1117 = vunpack.c.l.b16 %v791
    %v1118 = vunpack.c.h.b16 %v791
    %v1119 = vunpack.c.l.b16 %v792
    %v1120 = vunpack.c.h.b16 %v792
    %v1121 = vunpack.c.l.b16 %v793
    %v1122 = vunpack.c.h.b16 %v793
    %v1123 = vunpack.c.l.b16 %v794
    %v1124 = vunpack.c.h.b16 %v794
    %v1125 = vunpack.c.l.b16 %v795
    %v1126 = vunpack.c.h.b16 %v795
    %v1127 = vunpack.c.l.b16 %v796
    %v1128 = vunpack.c.h.b16 %v796
    %v1129 = vunpack.c.l.b16 %v797
    %v1130 = vunpack.c.h.b16 %v797
    %v1131 = vunpack.c.l.b16 %v798
    %v1132 = vunpack.c.h.b16 %v798
    %v1133 = vunpack.c.l.b16 %v799
    %v1134 = vunpack.c.h.b16 %v799
    %v1135 = vunpack.c.l.b16 %v800
    %v1136 = vunpack.c.h.b16 %v800
    %v1137 = vunpack.c.l.b16 %v801
    %v1138 = vunpack.c.h.b16 %v801
    %v1139 = vunpack.c.l.b16 %v802
    %v1140 = vunpack.c.h.b16 %v802
    %v1141 = vunpack.c.l.b16 %v803
    %v1142 = vunpack.c.h.b16 %v803
    %v1143 = vunpack.c.l.b16 %v804
    %v1144 = vunpack.c.h.b16 %v804
    %v1145 = vunpack.c.l.b16 %v805
    %v1146 = vunpack.c.h.b16 %v805
    %v1147 = vunpack.c.l.b16 %v806
    %v1148 = vunpack.c.h.b16 %v806
    %v1149 = vunpack.c.l.b16 %v807
    %v1150 = vunpack.c.h.b16 %v807
    %v1151 = vunpack.c.l.b16 %v808
    %v1152 = vunpack.c.h.b16 %v808
    %v1153 = vunpack.c.l.b16 %v809
    %v1154 = vunpack.c.h.b16 %v809
    %v1155 = vunpack.c.l.b16 %v810
    %v1156 = vunpack.c.h.b16 %v810
    %v1157 = vunpack.c.l.b16 %v811
    %v1158 = vunpack.c.h.b16 %v811
    %v1159 = vunpack.c.l.b16 %v812
    %v1160 = vunpack.c.h.b16 %v812
    %v1161 = vunpack.c.l.b16 %v813
    %v1162 = vunpack.c.h.b16 %v813
    %v1163 = vunpack.c.l.b16 %v814
    %v1164 = vunpack.c.h.b16 %v814
    %v1165 = vunpack.c.l.b16 %v815
    %v1166 = vunpack.c.h.b16 %v815
    %v1167 = vunpack.c.l.b16 %v816
    %v1168 = vunpack.c.h.b16 %v816
    %v1169 = vunpack.c.l.b16 %v817
    %v1170 = vunpack.c.h.b16 %v817
    %v1171 = vunpack.c.l.b16 %v818
    %v1172 = vunpack.c.h.b16 %v818
    %v1173 = vpack.c.b16 %v1111, %v1109
    %v1174 = vpack.c.b16 %v1112, %v1110
    %v1175 = vpack.c.b16 %v1115, %v1113
    %v1176 = vpack.c.b16 %v1116, %v1114
    %v1177 = vpack.c.b16 %v1119, %v1117
    %v1178 = vpack.c.b16 %v1120, %v1118
    %v1179 = vpack.c.b16 %v1123, %v1121
    %v1180 = vpack.c.b16 %v1124, %v1122
    %v1181 = vpack.c.b16 %v1127, %v1125
    %v1182 = vpack.c.b16 %v1128, %v1126
    %v1183 = vpack.c.b16 %v1131, %v1129
    %v1184 = vpack.c.b16 %v1132, %v1130
    %v1185 = vpack.c.b16 %v1135, %v1133
    %v1186 = vpack.c.b16 %v1136, %v1134
    %v1187 = vpack.c.b16 %v1139, %v1137
    %v1188 = vpack.c.b16 %v1140, %v1138
    %v1189 = vpack.c.b16 %v1143, %v1141
    %v1190 = vpack.c.b16 %v1144, %v1142
    %v1191 = vpack.c.b16 %v1147, %v1145
    %v1192 = vpack.c.b16 %v1148, %v1146
    %v1193 = vpack.c.b16 %v1151, %v1149
    %v1194 = vpack.c.b16 %v1152, %v1150
    %v1195 = vpack.c.b16 %v1155, %v1153
    %v1196 = vpack.c.b16 %v1156, %v1154
    %v1197 = vpack.c.b16 %v1159, %v1157
    %v1198 = vpack.c.b16 %v1160, %v1158
    %v1199 = vpack.c.b16 %v1163, %v1161
    %v1200 = vpack.c.b16 %v1164, %v1162
    %v1201 = vpack.c.b16 %v1167, %v1165
    %v1202 = vpack.c.b16 %v1168, %v1166
    %v1203 = vpack.c.b16 %v1171, %v1169
    %v1204 = vpack.c.b16 %v1172, %v1170
    %1237 = vmatprep.subr.bf16.mxu0 %v1188
    %1238 = vmatpush1.bf16.msra.mxu0 %v1187
    %1239 = vmatprep.subr.bf16.mxu0 %v1186
    %1240 = vmatpush1.bf16.msra.mxu0 %v1185
    %1241 = vmatprep.subr.bf16.mxu0 %v1184
    %1242 = vmatpush1.bf16.msra.mxu0 %v1183
    %1243 = vmatprep.subr.bf16.mxu0 %v1182
    %1244 = vmatpush1.bf16.msra.mxu0 %v1181
    %1245 = vmatprep.subr.bf16.mxu0 %v1180
    %1246 = vmatpush1.bf16.msra.mxu0 %v1179
    %1247 = vmatprep.subr.bf16.mxu0 %v1178
    %1248 = vmatpush1.bf16.msra.mxu0 %v1177
    %1249 = vmatprep.subr.bf16.mxu0 %v1176
    %1250 = vmatpush1.bf16.msra.mxu0 %v1175
    %1251 = vmatprep.subr.bf16.mxu0 %v1174
    %1252 = vmatpush1.bf16.msra.mxu0 %v1173
    %1253 = vmatprep.subr.bf16.mxu0 %v1204
    %1254 = vmatpush2.bf16.msra.mxu0 %v1203
    %1255 = vmatprep.subr.bf16.mxu0 %v1202
    %1256 = vmatpush2.bf16.msra.mxu0 %v1201
    %1257 = vmatprep.subr.bf16.mxu0 %v1200
    %1258 = vmatpush2.bf16.msra.mxu0 %v1199
    %1259 = vmatprep.subr.bf16.mxu0 %v1198
    %1260 = vmatpush2.bf16.msra.mxu0 %v1197
    %1261 = vmatprep.subr.bf16.mxu0 %v1196
    %1262 = vmatpush2.bf16.msra.mxu0 %v1195
    %1263 = vmatprep.subr.bf16.mxu0 %v1194
    %1264 = vmatpush2.bf16.msra.mxu0 %v1193
    %1265 = vmatprep.subr.bf16.mxu0 %v1192
    %1266 = vmatpush2.bf16.msra.mxu0 %v1191
    %1267 = vmatprep.subr.bf16.mxu0 %v1190
    %1268 = vmatpush2.bf16.msra.mxu0 %v1189
    %1269 = vmatprep.mubr.bf16.mxu0 %v820
    %1270 = vmatmul.mubr.bf16.gmra.mxu0 %v819
    %v1271 = vpop.f32.mrf.mxu0
    %v1272 = vadd.f32 0.0, %v1271
    %v1273 = vpop.f32.mrf.mxu0
    %v1274 = vadd.f32 0.0, %v1273
    %v1275 = vpop.f32.mrf.mxu0
    %v1276 = vadd.f32 0.0, %v1275
    %v1277 = vpop.f32.mrf.mxu0
    %v1278 = vadd.f32 0.0, %v1277
    %1279 = vdwg.mxu0
    %v1280 = vadd.f32 %v1069, %v1272
    %v1281 = vadd.f32 %v1071, %v1274
    %v1282 = vadd.f32 %v1073, %v1276
    %v1283 = vadd.f32 %v1075, %v1278
    %v1284 = vld [vmem:[%s5] sm:$0x3]
    %v1286 = vlaneseq
    %v1287 = vshrl.u32 %v1286, 7
    %v1288 = vsub.s32 0, %v1287
    %v1289 = vrot.slane %v1284, %v1288
    %v1290 = vlaneseq
    %v1291 = vshrl.u32 %v1290, 7
    %v1292 = vsub.s32 1, %v1291
    %v1293 = vrot.slane %v1284, %v1292
    %v1296 = vadd.f32 %v1280, %v1289
    %v1297 = vadd.f32 %v1281, %v1293
    %v1298 = vadd.f32 %v1282, %v1289
    %v1299 = vadd.f32 %v1283, %v1293
    %v1300 = vmax.f32 %v1296, 0.0
    %v1301 = vmax.f32 %v1297, 0.0
    %v1302 = vmax.f32 %v1298, 0.0
    %v1303 = vmax.f32 %v1299, 0.0
    %v1304 = vld [vmem:[#allocation10] sm:$0xff]
    %v1305 = vld [vmem:[#allocation10 + $0x8] sm:$0xff]
    %v1306 = vld [vmem:[#allocation10 + $0x10] sm:$0xff]
    %v1307 = vld [vmem:[#allocation10 + $0x18] sm:$0xff]
    %v1308 = vld [vmem:[#allocation10 + $0x20] sm:$0xff]
    %v1309 = vld [vmem:[#allocation10 + $0x28] sm:$0xff]
    %v1310 = vld [vmem:[#allocation10 + $0x30] sm:$0xff]
    %v1311 = vld [vmem:[#allocation10 + $0x38] sm:$0xff]
    %v1312 = vld [vmem:[#allocation10 + $0x40] sm:$0xff]
    %v1313 = vld [vmem:[#allocation10 + $0x48] sm:$0xff]
    %v1314 = vld [vmem:[#allocation10 + $0x50] sm:$0xff]
    %v1315 = vld [vmem:[#allocation10 + $0x58] sm:$0xff]
    %v1316 = vld [vmem:[#allocation10 + $0x60] sm:$0xff]
    %v1317 = vld [vmem:[#allocation10 + $0x68] sm:$0xff]
    %v1318 = vld [vmem:[#allocation10 + $0x70] sm:$0xff]
    %v1319 = vld [vmem:[#allocation10 + $0x78] sm:$0xff]
    %v1320 = vld [vmem:[#allocation10 + $0x80] sm:$0xff]
    %v1321 = vld [vmem:[#allocation10 + $0x88] sm:$0xff]
    %v1322 = vld [vmem:[#allocation10 + $0x90] sm:$0xff]
    %v1323 = vld [vmem:[#allocation10 + $0x98] sm:$0xff]
    %v1324 = vld [vmem:[#allocation10 + $0xa0] sm:$0xff]
    %v1325 = vld [vmem:[#allocation10 + $0xa8] sm:$0xff]
    %v1326 = vld [vmem:[#allocation10 + $0xb0] sm:$0xff]
    %v1327 = vld [vmem:[#allocation10 + $0xb8] sm:$0xff]
    %v1328 = vld [vmem:[#allocation10 + $0xc0] sm:$0xff]
    %v1329 = vld [vmem:[#allocation10 + $0xc8] sm:$0xff]
    %v1330 = vld [vmem:[#allocation10 + $0xd0] sm:$0xff]
    %v1331 = vld [vmem:[#allocation10 + $0xd8] sm:$0xff]
    %v1332 = vld [vmem:[#allocation10 + $0xe0] sm:$0xff]
    %v1333 = vld [vmem:[#allocation10 + $0xe8] sm:$0xff]
    %v1334 = vld [vmem:[#allocation10 + $0xf0] sm:$0xff]
    %v1335 = vld [vmem:[#allocation10 + $0xf8] sm:$0xff]
    %v1336 = vld [vmem:[#allocation11] sm:$0xff]
    %v1337 = vld [vmem:[#allocation11 + $0x8] sm:$0xff]
    %v1338 = vld [vmem:[#allocation11 + $0x10] sm:$0xff]
    %v1339 = vld [vmem:[#allocation11 + $0x18] sm:$0xff]
    %v1340 = vld [vmem:[#allocation11 + $0x20] sm:$0xff]
    %v1341 = vld [vmem:[#allocation11 + $0x28] sm:$0xff]
    %v1342 = vld [vmem:[#allocation11 + $0x30] sm:$0xff]
    %v1343 = vld [vmem:[#allocation11 + $0x38] sm:$0xff]
    %v1344 = vld [vmem:[#allocation11 + $0x40] sm:$0xff]
    %v1345 = vld [vmem:[#allocation11 + $0x48] sm:$0xff]
    %v1346 = vld [vmem:[#allocation11 + $0x50] sm:$0xff]
    %v1347 = vld [vmem:[#allocation11 + $0x58] sm:$0xff]
    %v1348 = vld [vmem:[#allocation11 + $0x60] sm:$0xff]
    %v1349 = vld [vmem:[#allocation11 + $0x68] sm:$0xff]
    %v1350 = vld [vmem:[#allocation11 + $0x70] sm:$0xff]
    %v1351 = vld [vmem:[#allocation11 + $0x78] sm:$0xff]
    %v1352 = vld [vmem:[#allocation11 + $0x80] sm:$0xff]
    %v1353 = vld [vmem:[#allocation11 + $0x88] sm:$0xff]
    %v1354 = vld [vmem:[#allocation11 + $0x90] sm:$0xff]
    %v1355 = vld [vmem:[#allocation11 + $0x98] sm:$0xff]
    %v1356 = vld [vmem:[#allocation11 + $0xa0] sm:$0xff]
    %v1357 = vld [vmem:[#allocation11 + $0xa8] sm:$0xff]
    %v1358 = vld [vmem:[#allocation11 + $0xb0] sm:$0xff]
    %v1359 = vld [vmem:[#allocation11 + $0xb8] sm:$0xff]
    %v1360 = vld [vmem:[#allocation11 + $0xc0] sm:$0xff]
    %v1361 = vld [vmem:[#allocation11 + $0xc8] sm:$0xff]
    %v1362 = vld [vmem:[#allocation11 + $0xd0] sm:$0xff]
    %v1363 = vld [vmem:[#allocation11 + $0xd8] sm:$0xff]
    %v1364 = vld [vmem:[#allocation11 + $0xe0] sm:$0xff]
    %v1365 = vld [vmem:[#allocation11 + $0xe8] sm:$0xff]
    %v1366 = vld [vmem:[#allocation11 + $0xf0] sm:$0xff]
    %v1367 = vld [vmem:[#allocation11 + $0xf8] sm:$0xff]
    %v1368 = vpack.c.bf16 %v1302, %v1300
    %v1369 = vpack.c.bf16 %v1303, %v1301
    %v1370 = vunpack.c.l.bf16 %v1368
    %v1371 = vunpack.c.l.bf16 %v1369
    %v1372 = vunpack.c.h.bf16 %v1368
    %v1373 = vunpack.c.h.bf16 %v1369
    %v1374 = vsub.f32 %v1300, %v1370
    %v1375 = vsub.f32 %v1301, %v1371
    %v1376 = vsub.f32 %v1302, %v1372
    %v1377 = vsub.f32 %v1303, %v1373
    %v1378 = vpack.c.bf16 %v1376, %v1374
    %v1379 = vpack.c.bf16 %v1377, %v1375
    %v1412 = vunpack.c.l.b16 %v1304
    %v1413 = vunpack.c.h.b16 %v1304
    %v1414 = vunpack.c.l.b16 %v1305
    %v1415 = vunpack.c.h.b16 %v1305
    %v1416 = vunpack.c.l.b16 %v1306
    %v1417 = vunpack.c.h.b16 %v1306
    %v1418 = vunpack.c.l.b16 %v1307
    %v1419 = vunpack.c.h.b16 %v1307
    %v1420 = vunpack.c.l.b16 %v1308
    %v1421 = vunpack.c.h.b16 %v1308
    %v1422 = vunpack.c.l.b16 %v1309
    %v1423 = vunpack.c.h.b16 %v1309
    %v1424 = vunpack.c.l.b16 %v1310
    %v1425 = vunpack.c.h.b16 %v1310
    %v1426 = vunpack.c.l.b16 %v1311
    %v1427 = vunpack.c.h.b16 %v1311
    %v1428 = vunpack.c.l.b16 %v1312
    %v1429 = vunpack.c.h.b16 %v1312
    %v1430 = vunpack.c.l.b16 %v1313
    %v1431 = vunpack.c.h.b16 %v1313
    %v1432 = vunpack.c.l.b16 %v1314
    %v1433 = vunpack.c.h.b16 %v1314
    %v1434 = vunpack.c.l.b16 %v1315
    %v1435 = vunpack.c.h.b16 %v1315
    %v1436 = vunpack.c.l.b16 %v1316
    %v1437 = vunpack.c.h.b16 %v1316
    %v1438 = vunpack.c.l.b16 %v1317
    %v1439 = vunpack.c.h.b16 %v1317
    %v1440 = vunpack.c.l.b16 %v1318
    %v1441 = vunpack.c.h.b16 %v1318
    %v1442 = vunpack.c.l.b16 %v1319
    %v1443 = vunpack.c.h.b16 %v1319
    %v1444 = vunpack.c.l.b16 %v1320
    %v1445 = vunpack.c.h.b16 %v1320
    %v1446 = vunpack.c.l.b16 %v1321
    %v1447 = vunpack.c.h.b16 %v1321
    %v1448 = vunpack.c.l.b16 %v1322
    %v1449 = vunpack.c.h.b16 %v1322
    %v1450 = vunpack.c.l.b16 %v1323
    %v1451 = vunpack.c.h.b16 %v1323
    %v1452 = vunpack.c.l.b16 %v1324
    %v1453 = vunpack.c.h.b16 %v1324
    %v1454 = vunpack.c.l.b16 %v1325
    %v1455 = vunpack.c.h.b16 %v1325
    %v1456 = vunpack.c.l.b16 %v1326
    %v1457 = vunpack.c.h.b16 %v1326
    %v1458 = vunpack.c.l.b16 %v1327
    %v1459 = vunpack.c.h.b16 %v1327
    %v1460 = vunpack.c.l.b16 %v1328
    %v1461 = vunpack.c.h.b16 %v1328
    %v1462 = vunpack.c.l.b16 %v1329
    %v1463 = vunpack.c.h.b16 %v1329
    %v1464 = vunpack.c.l.b16 %v1330
    %v1465 = vunpack.c.h.b16 %v1330
    %v1466 = vunpack.c.l.b16 %v1331
    %v1467 = vunpack.c.h.b16 %v1331
    %v1468 = vunpack.c.l.b16 %v1332
    %v1469 = vunpack.c.h.b16 %v1332
    %v1470 = vunpack.c.l.b16 %v1333
    %v1471 = vunpack.c.h.b16 %v1333
    %v1472 = vunpack.c.l.b16 %v1334
    %v1473 = vunpack.c.h.b16 %v1334
    %v1474 = vunpack.c.l.b16 %v1335
    %v1475 = vunpack.c.h.b16 %v1335
    %v1476 = vpack.c.b16 %v1414, %v1412
    %v1477 = vpack.c.b16 %v1415, %v1413
    %v1478 = vpack.c.b16 %v1418, %v1416
    %v1479 = vpack.c.b16 %v1419, %v1417
    %v1480 = vpack.c.b16 %v1422, %v1420
    %v1481 = vpack.c.b16 %v1423, %v1421
    %v1482 = vpack.c.b16 %v1426, %v1424
    %v1483 = vpack.c.b16 %v1427, %v1425
    %v1484 = vpack.c.b16 %v1430, %v1428
    %v1485 = vpack.c.b16 %v1431, %v1429
    %v1486 = vpack.c.b16 %v1434, %v1432
    %v1487 = vpack.c.b16 %v1435, %v1433
    %v1488 = vpack.c.b16 %v1438, %v1436
    %v1489 = vpack.c.b16 %v1439, %v1437
    %v1490 = vpack.c.b16 %v1442, %v1440
    %v1491 = vpack.c.b16 %v1443, %v1441
    %v1492 = vpack.c.b16 %v1446, %v1444
    %v1493 = vpack.c.b16 %v1447, %v1445
    %v1494 = vpack.c.b16 %v1450, %v1448
    %v1495 = vpack.c.b16 %v1451, %v1449
    %v1496 = vpack.c.b16 %v1454, %v1452
    %v1497 = vpack.c.b16 %v1455, %v1453
    %v1498 = vpack.c.b16 %v1458, %v1456
    %v1499 = vpack.c.b16 %v1459, %v1457
    %v1500 = vpack.c.b16 %v1462, %v1460
    %v1501 = vpack.c.b16 %v1463, %v1461
    %v1502 = vpack.c.b16 %v1466, %v1464
    %v1503 = vpack.c.b16 %v1467, %v1465
    %v1504 = vpack.c.b16 %v1470, %v1468
    %v1505 = vpack.c.b16 %v1471, %v1469
    %v1506 = vpack.c.b16 %v1474, %v1472
    %v1507 = vpack.c.b16 %v1475, %v1473
    %1540 = vmatprep.subr.bf16.mxu0 %v1491
    %1541 = vmatpush1.bf16.msra.mxu0 %v1490
    %1542 = vmatprep.subr.bf16.mxu0 %v1489
    %1543 = vmatpush1.bf16.msra.mxu0 %v1488
    %1544 = vmatprep.subr.bf16.mxu0 %v1487
    %1545 = vmatpush1.bf16.msra.mxu0 %v1486
    %1546 = vmatprep.subr.bf16.mxu0 %v1485
    %1547 = vmatpush1.bf16.msra.mxu0 %v1484
    %1548 = vmatprep.subr.bf16.mxu0 %v1483
    %1549 = vmatpush1.bf16.msra.mxu0 %v1482
    %1550 = vmatprep.subr.bf16.mxu0 %v1481
    %1551 = vmatpush1.bf16.msra.mxu0 %v1480
    %1552 = vmatprep.subr.bf16.mxu0 %v1479
    %1553 = vmatpush1.bf16.msra.mxu0 %v1478
    %1554 = vmatprep.subr.bf16.mxu0 %v1477
    %1555 = vmatpush1.bf16.msra.mxu0 %v1476
    %1556 = vmatprep.subr.bf16.mxu0 %v1507
    %1557 = vmatpush2.bf16.msra.mxu0 %v1506
    %1558 = vmatprep.subr.bf16.mxu0 %v1505
    %1559 = vmatpush2.bf16.msra.mxu0 %v1504
    %1560 = vmatprep.subr.bf16.mxu0 %v1503
    %1561 = vmatpush2.bf16.msra.mxu0 %v1502
    %1562 = vmatprep.subr.bf16.mxu0 %v1501
    %1563 = vmatpush2.bf16.msra.mxu0 %v1500
    %1564 = vmatprep.subr.bf16.mxu0 %v1499
    %1565 = vmatpush2.bf16.msra.mxu0 %v1498
    %1566 = vmatprep.subr.bf16.mxu0 %v1497
    %1567 = vmatpush2.bf16.msra.mxu0 %v1496
    %1568 = vmatprep.subr.bf16.mxu0 %v1495
    %1569 = vmatpush2.bf16.msra.mxu0 %v1494
    %1570 = vmatprep.subr.bf16.mxu0 %v1493
    %1571 = vmatpush2.bf16.msra.mxu0 %v1492
    %1572 = vmatprep.mubr.bf16.mxu0 %v1379
    %1573 = vmatmul.mubr.bf16.gmra.mxu0 %v1378
    %v1574 = vpop.f32.mrf.mxu0
    %v1575 = vadd.f32 0.0, %v1574
    %v1576 = vpop.f32.mrf.mxu0
    %v1577 = vadd.f32 0.0, %v1576
    %v1578 = vpop.f32.mrf.mxu0
    %v1579 = vadd.f32 0.0, %v1578
    %v1580 = vpop.f32.mrf.mxu0
    %v1581 = vadd.f32 0.0, %v1580
    %1582 = vdwg.mxu0
    %1583 = vmatprep.subr.bf16.mxu0 %v1491
    %1584 = vmatpush1.bf16.msra.mxu0 %v1490
    %1585 = vmatprep.subr.bf16.mxu0 %v1489
    %1586 = vmatpush1.bf16.msra.mxu0 %v1488
    %1587 = vmatprep.subr.bf16.mxu0 %v1487
    %1588 = vmatpush1.bf16.msra.mxu0 %v1486
    %1589 = vmatprep.subr.bf16.mxu0 %v1485
    %1590 = vmatpush1.bf16.msra.mxu0 %v1484
    %1591 = vmatprep.subr.bf16.mxu0 %v1483
    %1592 = vmatpush1.bf16.msra.mxu0 %v1482
    %1593 = vmatprep.subr.bf16.mxu0 %v1481
    %1594 = vmatpush1.bf16.msra.mxu0 %v1480
    %1595 = vmatprep.subr.bf16.mxu0 %v1479
    %1596 = vmatpush1.bf16.msra.mxu0 %v1478
    %1597 = vmatprep.subr.bf16.mxu0 %v1477
    %1598 = vmatpush1.bf16.msra.mxu0 %v1476
    %1599 = vmatprep.subr.bf16.mxu0 %v1507
    %1600 = vmatpush2.bf16.msra.mxu0 %v1506
    %1601 = vmatprep.subr.bf16.mxu0 %v1505
    %1602 = vmatpush2.bf16.msra.mxu0 %v1504
    %1603 = vmatprep.subr.bf16.mxu0 %v1503
    %1604 = vmatpush2.bf16.msra.mxu0 %v1502
    %1605 = vmatprep.subr.bf16.mxu0 %v1501
    %1606 = vmatpush2.bf16.msra.mxu0 %v1500
    %1607 = vmatprep.subr.bf16.mxu0 %v1499
    %1608 = vmatpush2.bf16.msra.mxu0 %v1498
    %1609 = vmatprep.subr.bf16.mxu0 %v1497
    %1610 = vmatpush2.bf16.msra.mxu0 %v1496
    %1611 = vmatprep.subr.bf16.mxu0 %v1495
    %1612 = vmatpush2.bf16.msra.mxu0 %v1494
    %1613 = vmatprep.subr.bf16.mxu0 %v1493
    %1614 = vmatpush2.bf16.msra.mxu0 %v1492
    %1615 = vmatprep.mubr.bf16.mxu0 %v1369
    %1616 = vmatmul.mubr.bf16.gmra.mxu0 %v1368
    %v1617 = vpop.f32.mrf.mxu0
    %v1618 = vadd.f32 %v1575, %v1617
    %v1619 = vpop.f32.mrf.mxu0
    %v1620 = vadd.f32 %v1577, %v1619
    %v1621 = vpop.f32.mrf.mxu0
    %v1622 = vadd.f32 %v1579, %v1621
    %v1623 = vpop.f32.mrf.mxu0
    %v1624 = vadd.f32 %v1581, %v1623
    %1625 = vdwg.mxu0
    %v1658 = vunpack.c.l.b16 %v1336
    %v1659 = vunpack.c.h.b16 %v1336
    %v1660 = vunpack.c.l.b16 %v1337
    %v1661 = vunpack.c.h.b16 %v1337
    %v1662 = vunpack.c.l.b16 %v1338
    %v1663 = vunpack.c.h.b16 %v1338
    %v1664 = vunpack.c.l.b16 %v1339
    %v1665 = vunpack.c.h.b16 %v1339
    %v1666 = vunpack.c.l.b16 %v1340
    %v1667 = vunpack.c.h.b16 %v1340
    %v1668 = vunpack.c.l.b16 %v1341
    %v1669 = vunpack.c.h.b16 %v1341
    %v1670 = vunpack.c.l.b16 %v1342
    %v1671 = vunpack.c.h.b16 %v1342
    %v1672 = vunpack.c.l.b16 %v1343
    %v1673 = vunpack.c.h.b16 %v1343
    %v1674 = vunpack.c.l.b16 %v1344
    %v1675 = vunpack.c.h.b16 %v1344
    %v1676 = vunpack.c.l.b16 %v1345
    %v1677 = vunpack.c.h.b16 %v1345
    %v1678 = vunpack.c.l.b16 %v1346
    %v1679 = vunpack.c.h.b16 %v1346
    %v1680 = vunpack.c.l.b16 %v1347
    %v1681 = vunpack.c.h.b16 %v1347
    %v1682 = vunpack.c.l.b16 %v1348
    %v1683 = vunpack.c.h.b16 %v1348
    %v1684 = vunpack.c.l.b16 %v1349
    %v1685 = vunpack.c.h.b16 %v1349
    %v1686 = vunpack.c.l.b16 %v1350
    %v1687 = vunpack.c.h.b16 %v1350
    %v1688 = vunpack.c.l.b16 %v1351
    %v1689 = vunpack.c.h.b16 %v1351
    %v1690 = vunpack.c.l.b16 %v1352
    %v1691 = vunpack.c.h.b16 %v1352
    %v1692 = vunpack.c.l.b16 %v1353
    %v1693 = vunpack.c.h.b16 %v1353
    %v1694 = vunpack.c.l.b16 %v1354
    %v1695 = vunpack.c.h.b16 %v1354
    %v1696 = vunpack.c.l.b16 %v1355
    %v1697 = vunpack.c.h.b16 %v1355
    %v1698 = vunpack.c.l.b16 %v1356
    %v1699 = vunpack.c.h.b16 %v1356
    %v1700 = vunpack.c.l.b16 %v1357
    %v1701 = vunpack.c.h.b16 %v1357
    %v1702 = vunpack.c.l.b16 %v1358
    %v1703 = vunpack.c.h.b16 %v1358
    %v1704 = vunpack.c.l.b16 %v1359
    %v1705 = vunpack.c.h.b16 %v1359
    %v1706 = vunpack.c.l.b16 %v1360
    %v1707 = vunpack.c.h.b16 %v1360
    %v1708 = vunpack.c.l.b16 %v1361
    %v1709 = vunpack.c.h.b16 %v1361
    %v1710 = vunpack.c.l.b16 %v1362
    %v1711 = vunpack.c.h.b16 %v1362
    %v1712 = vunpack.c.l.b16 %v1363
    %v1713 = vunpack.c.h.b16 %v1363
    %v1714 = vunpack.c.l.b16 %v1364
    %v1715 = vunpack.c.h.b16 %v1364
    %v1716 = vunpack.c.l.b16 %v1365
    %v1717 = vunpack.c.h.b16 %v1365
    %v1718 = vunpack.c.l.b16 %v1366
    %v1719 = vunpack.c.h.b16 %v1366
    %v1720 = vunpack.c.l.b16 %v1367
    %v1721 = vunpack.c.h.b16 %v1367
    %v1722 = vpack.c.b16 %v1660, %v1658
    %v1723 = vpack.c.b16 %v1661, %v1659
    %v1724 = vpack.c.b16 %v1664, %v1662
    %v1725 = vpack.c.b16 %v1665, %v1663
    %v1726 = vpack.c.b16 %v1668, %v1666
    %v1727 = vpack.c.b16 %v1669, %v1667
    %v1728 = vpack.c.b16 %v1672, %v1670
    %v1729 = vpack.c.b16 %v1673, %v1671
    %v1730 = vpack.c.b16 %v1676, %v1674
    %v1731 = vpack.c.b16 %v1677, %v1675
    %v1732 = vpack.c.b16 %v1680, %v1678
    %v1733 = vpack.c.b16 %v1681, %v1679
    %v1734 = vpack.c.b16 %v1684, %v1682
    %v1735 = vpack.c.b16 %v1685, %v1683
    %v1736 = vpack.c.b16 %v1688, %v1686
    %v1737 = vpack.c.b16 %v1689, %v1687
    %v1738 = vpack.c.b16 %v1692, %v1690
    %v1739 = vpack.c.b16 %v1693, %v1691
    %v1740 = vpack.c.b16 %v1696, %v1694
    %v1741 = vpack.c.b16 %v1697, %v1695
    %v1742 = vpack.c.b16 %v1700, %v1698
    %v1743 = vpack.c.b16 %v1701, %v1699
    %v1744 = vpack.c.b16 %v1704, %v1702
    %v1745 = vpack.c.b16 %v1705, %v1703
    %v1746 = vpack.c.b16 %v1708, %v1706
    %v1747 = vpack.c.b16 %v1709, %v1707
    %v1748 = vpack.c.b16 %v1712, %v1710
    %v1749 = vpack.c.b16 %v1713, %v1711
    %v1750 = vpack.c.b16 %v1716, %v1714
    %v1751 = vpack.c.b16 %v1717, %v1715
    %v1752 = vpack.c.b16 %v1720, %v1718
    %v1753 = vpack.c.b16 %v1721, %v1719
    %1786 = vmatprep.subr.bf16.mxu0 %v1737
    %1787 = vmatpush1.bf16.msra.mxu0 %v1736
    %1788 = vmatprep.subr.bf16.mxu0 %v1735
    %1789 = vmatpush1.bf16.msra.mxu0 %v1734
    %1790 = vmatprep.subr.bf16.mxu0 %v1733
    %1791 = vmatpush1.bf16.msra.mxu0 %v1732
    %1792 = vmatprep.subr.bf16.mxu0 %v1731
    %1793 = vmatpush1.bf16.msra.mxu0 %v1730
    %1794 = vmatprep.subr.bf16.mxu0 %v1729
    %1795 = vmatpush1.bf16.msra.mxu0 %v1728
    %1796 = vmatprep.subr.bf16.mxu0 %v1727
    %1797 = vmatpush1.bf16.msra.mxu0 %v1726
    %1798 = vmatprep.subr.bf16.mxu0 %v1725
    %1799 = vmatpush1.bf16.msra.mxu0 %v1724
    %1800 = vmatprep.subr.bf16.mxu0 %v1723
    %1801 = vmatpush1.bf16.msra.mxu0 %v1722
    %1802 = vmatprep.subr.bf16.mxu0 %v1753
    %1803 = vmatpush2.bf16.msra.mxu0 %v1752
    %1804 = vmatprep.subr.bf16.mxu0 %v1751
    %1805 = vmatpush2.bf16.msra.mxu0 %v1750
    %1806 = vmatprep.subr.bf16.mxu0 %v1749
    %1807 = vmatpush2.bf16.msra.mxu0 %v1748
    %1808 = vmatprep.subr.bf16.mxu0 %v1747
    %1809 = vmatpush2.bf16.msra.mxu0 %v1746
    %1810 = vmatprep.subr.bf16.mxu0 %v1745
    %1811 = vmatpush2.bf16.msra.mxu0 %v1744
    %1812 = vmatprep.subr.bf16.mxu0 %v1743
    %1813 = vmatpush2.bf16.msra.mxu0 %v1742
    %1814 = vmatprep.subr.bf16.mxu0 %v1741
    %1815 = vmatpush2.bf16.msra.mxu0 %v1740
    %1816 = vmatprep.subr.bf16.mxu0 %v1739
    %1817 = vmatpush2.bf16.msra.mxu0 %v1738
    %1818 = vmatprep.mubr.bf16.mxu0 %v1369
    %1819 = vmatmul.mubr.bf16.gmra.mxu0 %v1368
    %v1820 = vpop.f32.mrf.mxu0
    %v1821 = vadd.f32 0.0, %v1820
    %v1822 = vpop.f32.mrf.mxu0
    %v1823 = vadd.f32 0.0, %v1822
    %v1824 = vpop.f32.mrf.mxu0
    %v1825 = vadd.f32 0.0, %v1824
    %v1826 = vpop.f32.mrf.mxu0
    %v1827 = vadd.f32 0.0, %v1826
    %1828 = vdwg.mxu0
    %v1829 = vadd.f32 %v1618, %v1821
    %v1830 = vadd.f32 %v1620, %v1823
    %v1831 = vadd.f32 %v1622, %v1825
    %v1832 = vadd.f32 %v1624, %v1827
    %v1833 = vld [vmem:[%s8] sm:$0x3]
    %v1835 = vlaneseq
    %v1836 = vshrl.u32 %v1835, 7
    %v1837 = vsub.s32 0, %v1836
    %v1838 = vrot.slane %v1833, %v1837
    %v1839 = vlaneseq
    %v1840 = vshrl.u32 %v1839, 7
    %v1841 = vsub.s32 1, %v1840
    %v1842 = vrot.slane %v1833, %v1841
    %v1845 = vadd.f32 %v1829, %v1838
    %v1846 = vadd.f32 %v1830, %v1842
    %v1847 = vadd.f32 %v1831, %v1838
    %v1848 = vadd.f32 %v1832, %v1842
    %v1849 = vmax.f32 %v1845, 0.0
    %v1850 = vmax.f32 %v1846, 0.0
    %v1851 = vmax.f32 %v1847, 0.0
    %v1852 = vmax.f32 %v1848, 0.0
    %v1853 = vld [vmem:[#allocation13] sm:$0xff]
    %v1854 = vld [vmem:[#allocation13 + $0x8] sm:$0xff]
    %v1855 = vld [vmem:[#allocation13 + $0x10] sm:$0xff]
    %v1856 = vld [vmem:[#allocation13 + $0x18] sm:$0xff]
    %v1857 = vld [vmem:[#allocation13 + $0x20] sm:$0xff]
    %v1858 = vld [vmem:[#allocation13 + $0x28] sm:$0xff]
    %v1859 = vld [vmem:[#allocation13 + $0x30] sm:$0xff]
    %v1860 = vld [vmem:[#allocation13 + $0x38] sm:$0xff]
    %v1861 = vld [vmem:[#allocation13 + $0x40] sm:$0xff]
    %v1862 = vld [vmem:[#allocation13 + $0x48] sm:$0xff]
    %v1863 = vld [vmem:[#allocation13 + $0x50] sm:$0xff]
    %v1864 = vld [vmem:[#allocation13 + $0x58] sm:$0xff]
    %v1865 = vld [vmem:[#allocation13 + $0x60] sm:$0xff]
    %v1866 = vld [vmem:[#allocation13 + $0x68] sm:$0xff]
    %v1867 = vld [vmem:[#allocation13 + $0x70] sm:$0xff]
    %v1868 = vld [vmem:[#allocation13 + $0x78] sm:$0xff]
    %v1869 = vld [vmem:[#allocation13 + $0x80] sm:$0xff]
    %v1870 = vld [vmem:[#allocation13 + $0x88] sm:$0xff]
    %v1871 = vld [vmem:[#allocation13 + $0x90] sm:$0xff]
    %v1872 = vld [vmem:[#allocation13 + $0x98] sm:$0xff]
    %v1873 = vld [vmem:[#allocation13 + $0xa0] sm:$0xff]
    %v1874 = vld [vmem:[#allocation13 + $0xa8] sm:$0xff]
    %v1875 = vld [vmem:[#allocation13 + $0xb0] sm:$0xff]
    %v1876 = vld [vmem:[#allocation13 + $0xb8] sm:$0xff]
    %v1877 = vld [vmem:[#allocation13 + $0xc0] sm:$0xff]
    %v1878 = vld [vmem:[#allocation13 + $0xc8] sm:$0xff]
    %v1879 = vld [vmem:[#allocation13 + $0xd0] sm:$0xff]
    %v1880 = vld [vmem:[#allocation13 + $0xd8] sm:$0xff]
    %v1881 = vld [vmem:[#allocation13 + $0xe0] sm:$0xff]
    %v1882 = vld [vmem:[#allocation13 + $0xe8] sm:$0xff]
    %v1883 = vld [vmem:[#allocation13 + $0xf0] sm:$0xff]
    %v1884 = vld [vmem:[#allocation13 + $0xf8] sm:$0xff]
    %v1885 = vld [vmem:[#allocation14] sm:$0xff]
    %v1886 = vld [vmem:[#allocation14 + $0x8] sm:$0xff]
    %v1887 = vld [vmem:[#allocation14 + $0x10] sm:$0xff]
    %v1888 = vld [vmem:[#allocation14 + $0x18] sm:$0xff]
    %v1889 = vld [vmem:[#allocation14 + $0x20] sm:$0xff]
    %v1890 = vld [vmem:[#allocation14 + $0x28] sm:$0xff]
    %v1891 = vld [vmem:[#allocation14 + $0x30] sm:$0xff]
    %v1892 = vld [vmem:[#allocation14 + $0x38] sm:$0xff]
    %v1893 = vld [vmem:[#allocation14 + $0x40] sm:$0xff]
    %v1894 = vld [vmem:[#allocation14 + $0x48] sm:$0xff]
    %v1895 = vld [vmem:[#allocation14 + $0x50] sm:$0xff]
    %v1896 = vld [vmem:[#allocation14 + $0x58] sm:$0xff]
    %v1897 = vld [vmem:[#allocation14 + $0x60] sm:$0xff]
    %v1898 = vld [vmem:[#allocation14 + $0x68] sm:$0xff]
    %v1899 = vld [vmem:[#allocation14 + $0x70] sm:$0xff]
    %v1900 = vld [vmem:[#allocation14 + $0x78] sm:$0xff]
    %v1901 = vld [vmem:[#allocation14 + $0x80] sm:$0xff]
    %v1902 = vld [vmem:[#allocation14 + $0x88] sm:$0xff]
    %v1903 = vld [vmem:[#allocation14 + $0x90] sm:$0xff]
    %v1904 = vld [vmem:[#allocation14 + $0x98] sm:$0xff]
    %v1905 = vld [vmem:[#allocation14 + $0xa0] sm:$0xff]
    %v1906 = vld [vmem:[#allocation14 + $0xa8] sm:$0xff]
    %v1907 = vld [vmem:[#allocation14 + $0xb0] sm:$0xff]
    %v1908 = vld [vmem:[#allocation14 + $0xb8] sm:$0xff]
    %v1909 = vld [vmem:[#allocation14 + $0xc0] sm:$0xff]
    %v1910 = vld [vmem:[#allocation14 + $0xc8] sm:$0xff]
    %v1911 = vld [vmem:[#allocation14 + $0xd0] sm:$0xff]
    %v1912 = vld [vmem:[#allocation14 + $0xd8] sm:$0xff]
    %v1913 = vld [vmem:[#allocation14 + $0xe0] sm:$0xff]
    %v1914 = vld [vmem:[#allocation14 + $0xe8] sm:$0xff]
    %v1915 = vld [vmem:[#allocation14 + $0xf0] sm:$0xff]
    %v1916 = vld [vmem:[#allocation14 + $0xf8] sm:$0xff]
    %v1917 = vpack.c.bf16 %v1851, %v1849
    %v1918 = vpack.c.bf16 %v1852, %v1850
    %v1919 = vunpack.c.l.bf16 %v1917
    %v1920 = vunpack.c.l.bf16 %v1918
    %v1921 = vunpack.c.h.bf16 %v1917
    %v1922 = vunpack.c.h.bf16 %v1918
    %v1923 = vsub.f32 %v1849, %v1919
    %v1924 = vsub.f32 %v1850, %v1920
    %v1925 = vsub.f32 %v1851, %v1921
    %v1926 = vsub.f32 %v1852, %v1922
    %v1927 = vpack.c.bf16 %v1925, %v1923
    %v1928 = vpack.c.bf16 %v1926, %v1924
    %v1961 = vunpack.c.l.b16 %v1853
    %v1962 = vunpack.c.h.b16 %v1853
    %v1963 = vunpack.c.l.b16 %v1854
    %v1964 = vunpack.c.h.b16 %v1854
    %v1965 = vunpack.c.l.b16 %v1855
    %v1966 = vunpack.c.h.b16 %v1855
    %v1967 = vunpack.c.l.b16 %v1856
    %v1968 = vunpack.c.h.b16 %v1856
    %v1969 = vunpack.c.l.b16 %v1857
    %v1970 = vunpack.c.h.b16 %v1857
    %v1971 = vunpack.c.l.b16 %v1858
    %v1972 = vunpack.c.h.b16 %v1858
    %v1973 = vunpack.c.l.b16 %v1859
    %v1974 = vunpack.c.h.b16 %v1859
    %v1975 = vunpack.c.l.b16 %v1860
    %v1976 = vunpack.c.h.b16 %v1860
    %v1977 = vunpack.c.l.b16 %v1861
    %v1978 = vunpack.c.h.b16 %v1861
    %v1979 = vunpack.c.l.b16 %v1862
    %v1980 = vunpack.c.h.b16 %v1862
    %v1981 = vunpack.c.l.b16 %v1863
    %v1982 = vunpack.c.h.b16 %v1863
    %v1983 = vunpack.c.l.b16 %v1864
    %v1984 = vunpack.c.h.b16 %v1864
    %v1985 = vunpack.c.l.b16 %v1865
    %v1986 = vunpack.c.h.b16 %v1865
    %v1987 = vunpack.c.l.b16 %v1866
    %v1988 = vunpack.c.h.b16 %v1866
    %v1989 = vunpack.c.l.b16 %v1867
    %v1990 = vunpack.c.h.b16 %v1867
    %v1991 = vunpack.c.l.b16 %v1868
    %v1992 = vunpack.c.h.b16 %v1868
    %v1993 = vunpack.c.l.b16 %v1869
    %v1994 = vunpack.c.h.b16 %v1869
    %v1995 = vunpack.c.l.b16 %v1870
    %v1996 = vunpack.c.h.b16 %v1870
    %v1997 = vunpack.c.l.b16 %v1871
    %v1998 = vunpack.c.h.b16 %v1871
    %v1999 = vunpack.c.l.b16 %v1872
    %v2000 = vunpack.c.h.b16 %v1872
    %v2001 = vunpack.c.l.b16 %v1873
    %v2002 = vunpack.c.h.b16 %v1873
    %v2003 = vunpack.c.l.b16 %v1874
    %v2004 = vunpack.c.h.b16 %v1874
    %v2005 = vunpack.c.l.b16 %v1875
    %v2006 = vunpack.c.h.b16 %v1875
    %v2007 = vunpack.c.l.b16 %v1876
    %v2008 = vunpack.c.h.b16 %v1876
    %v2009 = vunpack.c.l.b16 %v1877
    %v2010 = vunpack.c.h.b16 %v1877
    %v2011 = vunpack.c.l.b16 %v1878
    %v2012 = vunpack.c.h.b16 %v1878
    %v2013 = vunpack.c.l.b16 %v1879
    %v2014 = vunpack.c.h.b16 %v1879
    %v2015 = vunpack.c.l.b16 %v1880
    %v2016 = vunpack.c.h.b16 %v1880
    %v2017 = vunpack.c.l.b16 %v1881
    %v2018 = vunpack.c.h.b16 %v1881
    %v2019 = vunpack.c.l.b16 %v1882
    %v2020 = vunpack.c.h.b16 %v1882
    %v2021 = vunpack.c.l.b16 %v1883
    %v2022 = vunpack.c.h.b16 %v1883
    %v2023 = vunpack.c.l.b16 %v1884
    %v2024 = vunpack.c.h.b16 %v1884
    %v2025 = vpack.c.b16 %v1963, %v1961
    %v2026 = vpack.c.b16 %v1964, %v1962
    %v2027 = vpack.c.b16 %v1967, %v1965
    %v2028 = vpack.c.b16 %v1968, %v1966
    %v2029 = vpack.c.b16 %v1971, %v1969
    %v2030 = vpack.c.b16 %v1972, %v1970
    %v2031 = vpack.c.b16 %v1975, %v1973
    %v2032 = vpack.c.b16 %v1976, %v1974
    %v2033 = vpack.c.b16 %v1979, %v1977
    %v2034 = vpack.c.b16 %v1980, %v1978
    %v2035 = vpack.c.b16 %v1983, %v1981
    %v2036 = vpack.c.b16 %v1984, %v1982
    %v2037 = vpack.c.b16 %v1987, %v1985
    %v2038 = vpack.c.b16 %v1988, %v1986
    %v2039 = vpack.c.b16 %v1991, %v1989
    %v2040 = vpack.c.b16 %v1992, %v1990
    %v2041 = vpack.c.b16 %v1995, %v1993
    %v2042 = vpack.c.b16 %v1996, %v1994
    %v2043 = vpack.c.b16 %v1999, %v1997
    %v2044 = vpack.c.b16 %v2000, %v1998
    %v2045 = vpack.c.b16 %v2003, %v2001
    %v2046 = vpack.c.b16 %v2004, %v2002
    %v2047 = vpack.c.b16 %v2007, %v2005
    %v2048 = vpack.c.b16 %v2008, %v2006
    %v2049 = vpack.c.b16 %v2011, %v2009
    %v2050 = vpack.c.b16 %v2012, %v2010
    %v2051 = vpack.c.b16 %v2015, %v2013
    %v2052 = vpack.c.b16 %v2016, %v2014
    %v2053 = vpack.c.b16 %v2019, %v2017
    %v2054 = vpack.c.b16 %v2020, %v2018
    %v2055 = vpack.c.b16 %v2023, %v2021
    %v2056 = vpack.c.b16 %v2024, %v2022
    %2089 = vmatprep.subr.bf16.mxu0 %v2040
    %2090 = vmatpush1.bf16.msra.mxu0 %v2039
    %2091 = vmatprep.subr.bf16.mxu0 %v2038
    %2092 = vmatpush1.bf16.msra.mxu0 %v2037
    %2093 = vmatprep.subr.bf16.mxu0 %v2036
    %2094 = vmatpush1.bf16.msra.mxu0 %v2035
    %2095 = vmatprep.subr.bf16.mxu0 %v2034
    %2096 = vmatpush1.bf16.msra.mxu0 %v2033
    %2097 = vmatprep.subr.bf16.mxu0 %v2032
    %2098 = vmatpush1.bf16.msra.mxu0 %v2031
    %2099 = vmatprep.subr.bf16.mxu0 %v2030
    %2100 = vmatpush1.bf16.msra.mxu0 %v2029
    %2101 = vmatprep.subr.bf16.mxu0 %v2028
    %2102 = vmatpush1.bf16.msra.mxu0 %v2027
    %2103 = vmatprep.subr.bf16.mxu0 %v2026
    %2104 = vmatpush1.bf16.msra.mxu0 %v2025
    %2105 = vmatprep.subr.bf16.mxu0 %v2056
    %2106 = vmatpush2.bf16.msra.mxu0 %v2055
    %2107 = vmatprep.subr.bf16.mxu0 %v2054
    %2108 = vmatpush2.bf16.msra.mxu0 %v2053
    %2109 = vmatprep.subr.bf16.mxu0 %v2052
    %2110 = vmatpush2.bf16.msra.mxu0 %v2051
    %2111 = vmatprep.subr.bf16.mxu0 %v2050
    %2112 = vmatpush2.bf16.msra.mxu0 %v2049
    %2113 = vmatprep.subr.bf16.mxu0 %v2048
    %2114 = vmatpush2.bf16.msra.mxu0 %v2047
    %2115 = vmatprep.subr.bf16.mxu0 %v2046
    %2116 = vmatpush2.bf16.msra.mxu0 %v2045
    %2117 = vmatprep.subr.bf16.mxu0 %v2044
    %2118 = vmatpush2.bf16.msra.mxu0 %v2043
    %2119 = vmatprep.subr.bf16.mxu0 %v2042
    %2120 = vmatpush2.bf16.msra.mxu0 %v2041
    %2121 = vmatprep.mubr.bf16.mxu0 %v1928
    %2122 = vmatmul.mubr.bf16.gmra.mxu0 %v1927
    %v2123 = vpop.f32.mrf.mxu0
    %v2124 = vadd.f32 0.0, %v2123
    %v2125 = vpop.f32.mrf.mxu0
    %v2126 = vadd.f32 0.0, %v2125
    %v2127 = vpop.f32.mrf.mxu0
    %v2128 = vadd.f32 0.0, %v2127
    %v2129 = vpop.f32.mrf.mxu0
    %v2130 = vadd.f32 0.0, %v2129
    %2131 = vdwg.mxu0
    %2132 = vmatprep.subr.bf16.mxu0 %v2040
    %2133 = vmatpush1.bf16.msra.mxu0 %v2039
    %2134 = vmatprep.subr.bf16.mxu0 %v2038
    %2135 = vmatpush1.bf16.msra.mxu0 %v2037
    %2136 = vmatprep.subr.bf16.mxu0 %v2036
    %2137 = vmatpush1.bf16.msra.mxu0 %v2035
    %2138 = vmatprep.subr.bf16.mxu0 %v2034
    %2139 = vmatpush1.bf16.msra.mxu0 %v2033
    %2140 = vmatprep.subr.bf16.mxu0 %v2032
    %2141 = vmatpush1.bf16.msra.mxu0 %v2031
    %2142 = vmatprep.subr.bf16.mxu0 %v2030
    %2143 = vmatpush1.bf16.msra.mxu0 %v2029
    %2144 = vmatprep.subr.bf16.mxu0 %v2028
    %2145 = vmatpush1.bf16.msra.mxu0 %v2027
    %2146 = vmatprep.subr.bf16.mxu0 %v2026
    %2147 = vmatpush1.bf16.msra.mxu0 %v2025
    %2148 = vmatprep.subr.bf16.mxu0 %v2056
    %2149 = vmatpush2.bf16.msra.mxu0 %v2055
    %2150 = vmatprep.subr.bf16.mxu0 %v2054
    %2151 = vmatpush2.bf16.msra.mxu0 %v2053
    %2152 = vmatprep.subr.bf16.mxu0 %v2052
    %2153 = vmatpush2.bf16.msra.mxu0 %v2051
    %2154 = vmatprep.subr.bf16.mxu0 %v2050
    %2155 = vmatpush2.bf16.msra.mxu0 %v2049
    %2156 = vmatprep.subr.bf16.mxu0 %v2048
    %2157 = vmatpush2.bf16.msra.mxu0 %v2047
    %2158 = vmatprep.subr.bf16.mxu0 %v2046
    %2159 = vmatpush2.bf16.msra.mxu0 %v2045
    %2160 = vmatprep.subr.bf16.mxu0 %v2044
    %2161 = vmatpush2.bf16.msra.mxu0 %v2043
    %2162 = vmatprep.subr.bf16.mxu0 %v2042
    %2163 = vmatpush2.bf16.msra.mxu0 %v2041
    %2164 = vmatprep.mubr.bf16.mxu0 %v1918
    %2165 = vmatmul.mubr.bf16.gmra.mxu0 %v1917
    %v2166 = vpop.f32.mrf.mxu0
    %v2167 = vadd.f32 %v2124, %v2166
    %v2168 = vpop.f32.mrf.mxu0
    %v2169 = vadd.f32 %v2126, %v2168
    %v2170 = vpop.f32.mrf.mxu0
    %v2171 = vadd.f32 %v2128, %v2170
    %v2172 = vpop.f32.mrf.mxu0
    %v2173 = vadd.f32 %v2130, %v2172
    %2174 = vdwg.mxu0
    %v2207 = vunpack.c.l.b16 %v1885
    %v2208 = vunpack.c.h.b16 %v1885
    %v2209 = vunpack.c.l.b16 %v1886
    %v2210 = vunpack.c.h.b16 %v1886
    %v2211 = vunpack.c.l.b16 %v1887
    %v2212 = vunpack.c.h.b16 %v1887
    %v2213 = vunpack.c.l.b16 %v1888
    %v2214 = vunpack.c.h.b16 %v1888
    %v2215 = vunpack.c.l.b16 %v1889
    %v2216 = vunpack.c.h.b16 %v1889
    %v2217 = vunpack.c.l.b16 %v1890
    %v2218 = vunpack.c.h.b16 %v1890
    %v2219 = vunpack.c.l.b16 %v1891
    %v2220 = vunpack.c.h.b16 %v1891
    %v2221 = vunpack.c.l.b16 %v1892
    %v2222 = vunpack.c.h.b16 %v1892
    %v2223 = vunpack.c.l.b16 %v1893
    %v2224 = vunpack.c.h.b16 %v1893
    %v2225 = vunpack.c.l.b16 %v1894
    %v2226 = vunpack.c.h.b16 %v1894
    %v2227 = vunpack.c.l.b16 %v1895
    %v2228 = vunpack.c.h.b16 %v1895
    %v2229 = vunpack.c.l.b16 %v1896
    %v2230 = vunpack.c.h.b16 %v1896
    %v2231 = vunpack.c.l.b16 %v1897
    %v2232 = vunpack.c.h.b16 %v1897
    %v2233 = vunpack.c.l.b16 %v1898
    %v2234 = vunpack.c.h.b16 %v1898
    %v2235 = vunpack.c.l.b16 %v1899
    %v2236 = vunpack.c.h.b16 %v1899
    %v2237 = vunpack.c.l.b16 %v1900
    %v2238 = vunpack.c.h.b16 %v1900
    %v2239 = vunpack.c.l.b16 %v1901
    %v2240 = vunpack.c.h.b16 %v1901
    %v2241 = vunpack.c.l.b16 %v1902
    %v2242 = vunpack.c.h.b16 %v1902
    %v2243 = vunpack.c.l.b16 %v1903
    %v2244 = vunpack.c.h.b16 %v1903
    %v2245 = vunpack.c.l.b16 %v1904
    %v2246 = vunpack.c.h.b16 %v1904
    %v2247 = vunpack.c.l.b16 %v1905
    %v2248 = vunpack.c.h.b16 %v1905
    %v2249 = vunpack.c.l.b16 %v1906
    %v2250 = vunpack.c.h.b16 %v1906
    %v2251 = vunpack.c.l.b16 %v1907
    %v2252 = vunpack.c.h.b16 %v1907
    %v2253 = vunpack.c.l.b16 %v1908
    %v2254 = vunpack.c.h.b16 %v1908
    %v2255 = vunpack.c.l.b16 %v1909
    %v2256 = vunpack.c.h.b16 %v1909
    %v2257 = vunpack.c.l.b16 %v1910
    %v2258 = vunpack.c.h.b16 %v1910
    %v2259 = vunpack.c.l.b16 %v1911
    %v2260 = vunpack.c.h.b16 %v1911
    %v2261 = vunpack.c.l.b16 %v1912
    %v2262 = vunpack.c.h.b16 %v1912
    %v2263 = vunpack.c.l.b16 %v1913
    %v2264 = vunpack.c.h.b16 %v1913
    %v2265 = vunpack.c.l.b16 %v1914
    %v2266 = vunpack.c.h.b16 %v1914
    %v2267 = vunpack.c.l.b16 %v1915
    %v2268 = vunpack.c.h.b16 %v1915
    %v2269 = vunpack.c.l.b16 %v1916
    %v2270 = vunpack.c.h.b16 %v1916
    %v2271 = vpack.c.b16 %v2209, %v2207
    %v2272 = vpack.c.b16 %v2210, %v2208
    %v2273 = vpack.c.b16 %v2213, %v2211
    %v2274 = vpack.c.b16 %v2214, %v2212
    %v2275 = vpack.c.b16 %v2217, %v2215
    %v2276 = vpack.c.b16 %v2218, %v2216
    %v2277 = vpack.c.b16 %v2221, %v2219
    %v2278 = vpack.c.b16 %v2222, %v2220
    %v2279 = vpack.c.b16 %v2225, %v2223
    %v2280 = vpack.c.b16 %v2226, %v2224
    %v2281 = vpack.c.b16 %v2229, %v2227
    %v2282 = vpack.c.b16 %v2230, %v2228
    %v2283 = vpack.c.b16 %v2233, %v2231
    %v2284 = vpack.c.b16 %v2234, %v2232
    %v2285 = vpack.c.b16 %v2237, %v2235
    %v2286 = vpack.c.b16 %v2238, %v2236
    %v2287 = vpack.c.b16 %v2241, %v2239
    %v2288 = vpack.c.b16 %v2242, %v2240
    %v2289 = vpack.c.b16 %v2245, %v2243
    %v2290 = vpack.c.b16 %v2246, %v2244
    %v2291 = vpack.c.b16 %v2249, %v2247
    %v2292 = vpack.c.b16 %v2250, %v2248
    %v2293 = vpack.c.b16 %v2253, %v2251
    %v2294 = vpack.c.b16 %v2254, %v2252
    %v2295 = vpack.c.b16 %v2257, %v2255
    %v2296 = vpack.c.b16 %v2258, %v2256
    %v2297 = vpack.c.b16 %v2261, %v2259
    %v2298 = vpack.c.b16 %v2262, %v2260
    %v2299 = vpack.c.b16 %v2265, %v2263
    %v2300 = vpack.c.b16 %v2266, %v2264
    %v2301 = vpack.c.b16 %v2269, %v2267
    %v2302 = vpack.c.b16 %v2270, %v2268
    %2335 = vmatprep.subr.bf16.mxu0 %v2286
    %2336 = vmatpush1.bf16.msra.mxu0 %v2285
    %2337 = vmatprep.subr.bf16.mxu0 %v2284
    %2338 = vmatpush1.bf16.msra.mxu0 %v2283
    %2339 = vmatprep.subr.bf16.mxu0 %v2282
    %2340 = vmatpush1.bf16.msra.mxu0 %v2281
    %2341 = vmatprep.subr.bf16.mxu0 %v2280
    %2342 = vmatpush1.bf16.msra.mxu0 %v2279
    %2343 = vmatprep.subr.bf16.mxu0 %v2278
    %2344 = vmatpush1.bf16.msra.mxu0 %v2277
    %2345 = vmatprep.subr.bf16.mxu0 %v2276
    %2346 = vmatpush1.bf16.msra.mxu0 %v2275
    %2347 = vmatprep.subr.bf16.mxu0 %v2274
    %2348 = vmatpush1.bf16.msra.mxu0 %v2273
    %2349 = vmatprep.subr.bf16.mxu0 %v2272
    %2350 = vmatpush1.bf16.msra.mxu0 %v2271
    %2351 = vmatprep.subr.bf16.mxu0 %v2302
    %2352 = vmatpush2.bf16.msra.mxu0 %v2301
    %2353 = vmatprep.subr.bf16.mxu0 %v2300
    %2354 = vmatpush2.bf16.msra.mxu0 %v2299
    %2355 = vmatprep.subr.bf16.mxu0 %v2298
    %2356 = vmatpush2.bf16.msra.mxu0 %v2297
    %2357 = vmatprep.subr.bf16.mxu0 %v2296
    %2358 = vmatpush2.bf16.msra.mxu0 %v2295
    %2359 = vmatprep.subr.bf16.mxu0 %v2294
    %2360 = vmatpush2.bf16.msra.mxu0 %v2293
    %2361 = vmatprep.subr.bf16.mxu0 %v2292
    %2362 = vmatpush2.bf16.msra.mxu0 %v2291
    %2363 = vmatprep.subr.bf16.mxu0 %v2290
    %2364 = vmatpush2.bf16.msra.mxu0 %v2289
    %2365 = vmatprep.subr.bf16.mxu0 %v2288
    %2366 = vmatpush2.bf16.msra.mxu0 %v2287
    %2367 = vmatprep.mubr.bf16.mxu0 %v1918
    %2368 = vmatmul.mubr.bf16.gmra.mxu0 %v1917
    %v2369 = vpop.f32.mrf.mxu0
    %v2370 = vadd.f32 0.0, %v2369
    %v2371 = vpop.f32.mrf.mxu0
    %v2372 = vadd.f32 0.0, %v2371
    %v2373 = vpop.f32.mrf.mxu0
    %v2374 = vadd.f32 0.0, %v2373
    %v2375 = vpop.f32.mrf.mxu0
    %v2376 = vadd.f32 0.0, %v2375
    %2377 = vdwg.mxu0
    %v2378 = vadd.f32 %v2167, %v2370
    %v2379 = vadd.f32 %v2169, %v2372
    %v2380 = vadd.f32 %v2171, %v2374
    %v2381 = vadd.f32 %v2173, %v2376
    %v2382 = vld [vmem:[%s11] sm:$0x3]
    %v2384 = vlaneseq
    %v2385 = vshrl.u32 %v2384, 7
    %v2386 = vsub.s32 0, %v2385
    %v2387 = vrot.slane %v2382, %v2386
    %v2388 = vlaneseq
    %v2389 = vshrl.u32 %v2388, 7
    %v2390 = vsub.s32 1, %v2389
    %v2391 = vrot.slane %v2382, %v2390
    %v2394 = vadd.f32 %v2378, %v2387
    %v2395 = vadd.f32 %v2379, %v2391
    %v2396 = vadd.f32 %v2380, %v2387
    %v2397 = vadd.f32 %v2381, %v2391
    %v2398 = vmax.f32 %v2394, 0.0
    %v2399 = vmax.f32 %v2395, 0.0
    %v2400 = vmax.f32 %v2396, 0.0
    %v2401 = vmax.f32 %v2397, 0.0
    %2402 = vst [vmem:[#allocation16] sm:$0xff] %v2398
    %2403 = vst [vmem:[#allocation16 + $0x8] sm:$0xff] %v2399
    %2404 = vst [vmem:[#allocation16 + $0x10] sm:$0xff] %v2400
    %2405 = vst [vmem:[#allocation16 + $0x18] sm:$0xff] %v2401
    // Predicated region
    $region82: #{mlp_sum_agg_mlp.1} parent=1 // pred_check
      _
    $region83: #{mlp_sum_agg_mlp.1} parent=1 // pred_check_branch
      %2407 = sbr.rel (0) target = $region85
    $region84: #{mlp_sum_agg_mlp.1} parent=1 // pred_region
      %s2409 = ssub.s32 512, 512
      %2410 = vsyncadd [#allocation4], %s2409
      %s2411 = sshll.u32 [#allocation16], 4
      %s2412 = int_to_ptr.vmem [resolvable:$true] %s2411
      %2417 = dma.vmem_to_hbm [thread:$0]  %s2412, 512, %s12, [#allocation4], 256, 256, 16
    $region85: #{mlp_sum_agg_mlp.1} parent=1 // pred_fallthru
      _
    // Predicated region
    $region86: #{mlp_sum_agg_mlp.1} parent=1 // pred_check
      _
    $region87: #{mlp_sum_agg_mlp.1} parent=1 // pred_check_branch
      %2419 = sbr.rel (0) target = $region89
    $region88: #{mlp_sum_agg_mlp.1} parent=1 // pred_region
      %2420 = dma.done [#allocation4], 512
    $region89: #{mlp_sum_agg_mlp.1} parent=1 // pred_fallthru
      _
    %2421 = vsyncpa [#allocation3], 1
    %2422 = vsyncpa [#allocation6], 1
    %2423 = vsyncpa [#allocation9], 1
    %2424 = vsyncpa [#allocation12], 1
    %2425 = vsyncpa [#allocation15], 1
    %2426 = vsyncpa [#allocation4], 1

</llo_original>
